<compile_context>
chip_gen: v7x
topology: tpu7x:2x2x1
jax: 0.10.0
libtpu: 0.0.40
codegen_flags: <defaults>
</compile_context>

<pallas_src>
import jax
import jax.numpy as jnp
from jax.experimental import pallas as pl
from jax.experimental.pallas import tpu as pltpu


def lstm_head_kernel(x_ref, wih_hbm, whh_hbm, b_ref, fcw_ref, fcb_ref,
                     out_ref, h_sc, c_sc, wih_sc, whh_sc):
    step = pl.program_id(0)
    B, T, H = x_ref.shape            # block shape: (batch, time-chunk, hidden)
    cdt = wih_sc.dtype               # MXU operand dtype (bf16)

    @pl.when(step == 0)
    def _init():
        # Single-buffered weight load: recurrent weights are DMA'd HBM->VMEM
        # exactly once and reused by every grid step (scratch persists).
        pltpu.sync_copy(wih_hbm, wih_sc)
        pltpu.sync_copy(whh_hbm, whh_sc)
        h_sc[...] = jnp.zeros_like(h_sc)
        c_sc[...] = jnp.zeros_like(c_sc)

    # ---- hoisted input projection (no sequential dependency) --------------
    # One bulk (B*T, H) @ (H, 4H) matmul per chunk; bias folded in here so the
    # recurrent loop below only does h @ W_hh^T + gx[:, t, :].
    x_chunk = x_ref[...].astype(cdt).reshape(B * T, H)
    gx = jnp.dot(x_chunk, wih_sc[...], preferred_element_type=jnp.float32)
    gx = (gx + b_ref[...]).reshape(B, T, 4 * H)          # f32, (B, T, 4H)

    h = h_sc[...]
    c = c_sc[...]
    whh = whh_sc[...]

    # ---- serial recurrence over the T timesteps of this chunk -------------
    # Fully unrolled with a static t so the gate slices are compile-time
    # slices and the gx[:, t, :] extraction stays off the h->h critical path.
    for t in range(T):
        gates = gx[:, t, :] + jnp.dot(h.astype(cdt), whh,
                                      preferred_element_type=jnp.float32)
        # PyTorch LSTM gate order: input, forget, cell(g), output.
        # (For H a multiple of 128 -- e.g. BERT's 768 -- these are
        #  lane-aligned vreg views.)
        i_g = jax.nn.sigmoid(gates[:, 0 * H:1 * H])
        f_g = jax.nn.sigmoid(gates[:, 1 * H:2 * H])
        g_g = jnp.tanh(gates[:, 2 * H:3 * H])
        o_g = jax.nn.sigmoid(gates[:, 3 * H:4 * H])
        c = f_g * c + i_g * g_g
        h = o_g * jnp.tanh(c)

    h_sc[...] = h
    c_sc[...] = c

    @pl.when(step == pl.num_programs(0) - 1)
    def _finalize():
        # Fused fc head on the last hidden state (written back exactly once).
        out_ref[...] = (jnp.dot(h.astype(cdt), fcw_ref[...],
                                preferred_element_type=jnp.float32)
                        + fcb_ref[...]).astype(out_ref.dtype)


def _pick_time_chunk(seq_len, requested=None):
    """Timesteps per grid step; must divide S and respect the sublane rule."""
    if requested is not None:
        assert seq_len % requested == 0
        return requested
    for cand in (32, 16, 8):
        if seq_len % cand == 0:
            return cand
    return seq_len   # fallback: whole sequence in one grid step


def _round_up(n, m):
    return -(-n // m) * m


def _vmem_bytes(entries):
    """Rough (8,128)-padded VMEM footprint for (shape, dtype, n_buffers)."""
    total = 0
    for shape, dtype, nbuf in entries:
        dims = list(shape)
        dims[-1] = _round_up(dims[-1], 128)
        if len(dims) >= 2:
            dims[-2] = _round_up(dims[-2], 8)
        n = 1
        for d in dims:
            n *= d
        total += n * jnp.dtype(dtype).itemsize * nbuf
    return total


def bert_lstm_header_forward(x_bsh, w_ih, w_hh, b_ih, b_hh, fc_w, fc_b,
                             num_classes, *, time_chunk=None,
                             compute_dtype=jnp.bfloat16):
    """x_bsh: (B, S, H). Weights in PyTorch layout:
       w_ih, w_hh: (4H, H); b_ih, b_hh: (4H,); fc_w: (C, H); fc_b: (C,)."""
    B, S, H = x_bsh.shape
    C = num_classes
    T = _pick_time_chunk(S, time_chunk)

    wih_t = jnp.transpose(w_ih).astype(compute_dtype)    # (H, 4H)
    whh_t = jnp.transpose(w_hh).astype(compute_dtype)    # (H, 4H)
    bias = (b_ih + b_hh).astype(jnp.float32).reshape(1, 4 * H)
    fcw_t = jnp.transpose(fc_w).astype(compute_dtype)    # (H, C)
    fcb = fc_b.astype(jnp.float32).reshape(1, C)

    vmem_limit = int(min(max(_vmem_bytes([
        ((B, T, H), x_bsh.dtype, 2),          # x chunk (double-buffered)
        ((1, 4 * H), jnp.float32, 2),         # bias block
        ((H, C), compute_dtype, 2),           # fc weight block
        ((1, C), jnp.float32, 2),             # fc bias block
        ((B, C), jnp.float32, 2),             # output block
        ((B, H), jnp.float32, 2),             # h + c scratch
        ((H, 4 * H), compute_dtype, 2),       # W_ih^T + W_hh^T scratch (1 buf each)
    ]) + (4 << 20), 32 << 20), 100 << 20))

    full = lambda arr: pl.BlockSpec(arr.shape, lambda t: (0,) * arr.ndim)

    return pl.pallas_call(
        lstm_head_kernel,
        out_shape=jax.ShapeDtypeStruct((B, C), jnp.float32),
        grid_spec=pltpu.PrefetchScalarGridSpec(
            num_scalar_prefetch=0,
            grid=(S // T,),
            in_specs=[
                pl.BlockSpec((B, T, H), lambda t: (0, t, 0)),  # x, T timesteps
                pl.BlockSpec(memory_space=pl.ANY),             # W_ih^T in HBM
                pl.BlockSpec(memory_space=pl.ANY),             # W_hh^T in HBM
                full(bias), full(fcw_t), full(fcb),
            ],
            out_specs=pl.BlockSpec((B, C), lambda t: (0, 0)),
            scratch_shapes=[
                pltpu.VMEM((B, H), jnp.float32),           # h state
                pltpu.VMEM((B, H), jnp.float32),           # c state
                pltpu.VMEM((H, 4 * H), compute_dtype),     # W_ih^T (single buf)
                pltpu.VMEM((H, 4 * H), compute_dtype),     # W_hh^T (single buf)
            ],
        ),
        compiler_params=pltpu.CompilerParams(
            dimension_semantics=("arbitrary",),   # time is a true recurrence
            vmem_limit_bytes=vmem_limit,
        ),
    )(x_bsh, wih_t, whh_t, bias, fcw_t, fcb)


def reference_forward(x_bsh, w_ih, w_hh, b_ih, b_hh, fc_w, fc_b,
                      matmul_dtype=jnp.float32):
    """Pure-JAX reference matching torch.nn.LSTM + Linear.  `matmul_dtype`
    optionally mirrors the kernel's bf16 MXU inputs for a tight check."""
    B, S, H = x_bsh.shape
    wih_t = jnp.transpose(w_ih).astype(matmul_dtype)
    whh_t = jnp.transpose(w_hh).astype(matmul_dtype)
    bias = (b_ih + b_hh).astype(jnp.float32)
    fcw_t = jnp.transpose(fc_w).astype(matmul_dtype)

    def step(carry, x_t):
        h, c = carry
        gates = (jnp.dot(x_t.astype(matmul_dtype), wih_t,
                         preferred_element_type=jnp.float32)
                 + jnp.dot(h.astype(matmul_dtype), whh_t,
                           preferred_element_type=jnp.float32)
                 + bias)
        i = jax.nn.sigmoid(gates[:, 0 * H:1 * H])
        f = jax.nn.sigmoid(gates[:, 1 * H:2 * H])
        g = jnp.tanh(gates[:, 2 * H:3 * H])
        o = jax.nn.sigmoid(gates[:, 3 * H:4 * H])
        c = f * c + i * g
        h = o * jnp.tanh(c)
        return (h, c), None

    init = (jnp.zeros((B, H), jnp.float32), jnp.zeros((B, H), jnp.float32))
    (h_last, _), _ = jax.lax.scan(step, init, jnp.transpose(x_bsh, (1, 0, 2)))
    return (jnp.dot(h_last.astype(matmul_dtype), fcw_t,
                    preferred_element_type=jnp.float32)
            + fc_b.astype(jnp.float32))


if __name__ == "__main__":
    B, S, H, C = 2, 8, 32, 4

    key = jax.random.PRNGKey(0)
    ks = jax.random.split(key, 8)
    bound = 1.0 / (H ** 0.5)   # PyTorch default uniform init range

    x = jax.random.normal(ks[0], (B, S, H), dtype=jnp.float32)
    w_ih = jax.random.uniform(ks[1], (4 * H, H), minval=-bound, maxval=bound)
    w_hh = jax.random.uniform(ks[2], (4 * H, H), minval=-bound, maxval=bound)
    b_ih = jax.random.uniform(ks[3], (4 * H,), minval=-bound, maxval=bound)
    b_hh = jax.random.uniform(ks[4], (4 * H,), minval=-bound, maxval=bound)
    fc_w = jax.random.uniform(ks[5], (C, H), minval=-bound, maxval=bound)
    fc_b = jax.random.uniform(ks[6], (C,), minval=-bound, maxval=bound)

    out = bert_lstm_header_forward(x, w_ih, w_hh, b_ih, b_hh, fc_w, fc_b, C)
    out = jax.block_until_ready(out)
    assert out.shape == (B, C)

    # Tight check against a reference that uses the same bf16 MXU inputs.
    ref_bf16 = reference_forward(x, w_ih, w_hh, b_ih, b_hh, fc_w, fc_b,
                                 matmul_dtype=jnp.bfloat16)
    assert jnp.allclose(out, ref_bf16, atol=2e-3, rtol=2e-3), (out, ref_bf16)

    # Loose sanity check against the pure-f32 reference (bf16 matmul inputs
    # introduce ~1e-2-level differences).
    ref_f32 = reference_forward(x, w_ih, w_hh, b_ih, b_hh, fc_w, fc_b,
                                matmul_dtype=jnp.float32)
    assert jnp.allclose(out, ref_f32, atol=7e-2, rtol=7e-2), (out, ref_f32)

    print("KERNEL_OK")
</pallas_src>

<mosaic_0001>
module attributes {stable_mosaic.version = 11 : i64} {
  func.func @lstm_head_kernel(%arg0: i32, %arg1: memref<2x8x32xf32, #tpu.memory_space<vmem>>, %arg2: memref<32x128xbf16, #tpu.memory_space<any>>, %arg3: memref<32x128xbf16, #tpu.memory_space<any>>, %arg4: memref<1x128xf32, #tpu.memory_space<vmem>>, %arg5: memref<32x4xbf16, #tpu.memory_space<vmem>>, %arg6: memref<1x4xf32, #tpu.memory_space<vmem>>, %arg7: memref<2x4xf32, #tpu.memory_space<vmem>>, %arg8: memref<2x32xf32, #tpu.memory_space<vmem>>, %arg9: memref<2x32xf32, #tpu.memory_space<vmem>>, %arg10: memref<32x128xbf16, #tpu.memory_space<vmem>>, %arg11: memref<32x128xbf16, #tpu.memory_space<vmem>>) attributes {dimension_semantics = [#tpu.dimension_semantics<arbitrary>], iteration_bounds = array<i64: 1>, scalar_prefetch = 0 : i64, scratch_operands = 4 : i64, tpu.core_type = #tpu.core_type<tc>, window_params = [{transform_indices = @transform_0, window_bounds = array<i64: 2, 8, 32>}, {}, {}, {pipeline_mode = #tpu.pipeline_mode<synchronous>, transform_indices = @transform_3, window_bounds = array<i64: 1, 128>}, {pipeline_mode = #tpu.pipeline_mode<synchronous>, transform_indices = @transform_4, window_bounds = array<i64: 32, 4>}, {pipeline_mode = #tpu.pipeline_mode<synchronous>, transform_indices = @transform_5, window_bounds = array<i64: 1, 4>}, {pipeline_mode = #tpu.pipeline_mode<synchronous>, transform_indices = @transform_6, window_bounds = array<i64: 2, 4>}]} {
    %c0_i32 = arith.constant 0 : i32
    %0 = arith.cmpi eq, %arg0, %c0_i32 : i32
    %1 = arith.extui %0 : i1 to i32
    %c0_i32_0 = arith.constant 0 : i32
    %2 = arith.cmpi ne, %1, %c0_i32_0 : i32
    scf.if %2 {
      "tpu.region"() ({
        %264 = tpu.sem_alloc : memref<!tpu.dma_semaphore, #tpu.memory_space<semaphore_mem>>
        tpu.enqueue_dma source(%arg2 : memref<32x128xbf16, #tpu.memory_space<any>>) target(%arg10 : memref<32x128xbf16, #tpu.memory_space<vmem>>) target_semaphore(%264 : memref<!tpu.dma_semaphore, #tpu.memory_space<semaphore_mem>>)
        tpu.wait_dma2 semaphore(%264 : memref<!tpu.dma_semaphore, #tpu.memory_space<semaphore_mem>>) src(%arg2 : memref<32x128xbf16, #tpu.memory_space<any>>) dst(%arg10 : memref<32x128xbf16, #tpu.memory_space<vmem>>)
        tpu.yield
      }) : () -> ()
      "tpu.region"() ({
        %264 = tpu.sem_alloc : memref<!tpu.dma_semaphore, #tpu.memory_space<semaphore_mem>>
        tpu.enqueue_dma source(%arg3 : memref<32x128xbf16, #tpu.memory_space<any>>) target(%arg11 : memref<32x128xbf16, #tpu.memory_space<vmem>>) target_semaphore(%264 : memref<!tpu.dma_semaphore, #tpu.memory_space<semaphore_mem>>)
        tpu.wait_dma2 semaphore(%264 : memref<!tpu.dma_semaphore, #tpu.memory_space<semaphore_mem>>) src(%arg3 : memref<32x128xbf16, #tpu.memory_space<any>>) dst(%arg11 : memref<32x128xbf16, #tpu.memory_space<vmem>>)
        tpu.yield
      }) : () -> ()
      %cst_51 = arith.constant 0.000000e+00 : f32
      %260 = vector.broadcast %cst_51 : f32 to vector<2x32xf32>
      %c0_52 = arith.constant 0 : index
      %c0_53 = arith.constant 0 : index
      %261 = vector.load %arg8[%c0_52, %c0_53] : memref<2x32xf32, #tpu.memory_space<vmem>>, vector<2x32xf32>
      tpu.vector_store %arg8[%c0_52, %c0_53], %260 {strides = array<i32>} : memref<2x32xf32, #tpu.memory_space<vmem>>, vector<2x32xf32>,
      %cst_54 = arith.constant 0.000000e+00 : f32
      %262 = vector.broadcast %cst_54 : f32 to vector<2x32xf32>
      %c0_55 = arith.constant 0 : index
      %c0_56 = arith.constant 0 : index
      %263 = vector.load %arg9[%c0_55, %c0_56] : memref<2x32xf32, #tpu.memory_space<vmem>>, vector<2x32xf32>
      tpu.vector_store %arg9[%c0_55, %c0_56], %262 {strides = array<i32>} : memref<2x32xf32, #tpu.memory_space<vmem>>, vector<2x32xf32>,
    } else {
    }
    %c0 = arith.constant 0 : index
    %c0_1 = arith.constant 0 : index
    %c0_2 = arith.constant 0 : index
    %3 = vector.load %arg1[%c0, %c0_1, %c0_2] : memref<2x8x32xf32, #tpu.memory_space<vmem>>, vector<2x8x32xf32>
    %4 = arith.truncf %3 : vector<2x8x32xf32> to vector<2x8x32xbf16>
    %5 = vector.shape_cast %4 : vector<2x8x32xbf16> to vector<16x32xbf16>
    %c0_3 = arith.constant 0 : index
    %c0_4 = arith.constant 0 : index
    %6 = vector.load %arg10[%c0_3, %c0_4] : memref<32x128xbf16, #tpu.memory_space<vmem>>, vector<32x128xbf16>
    %cst = arith.constant dense<0.000000e+00> : vector<16x128xf32>
    %7 = tpu.matmul %5, %6, %cst {dimension_numbers = #tpu.dot_dimension_numbers<[1], [0], [0], [1], [0, 0, 1, 1], [], []>} : vector<16x32xbf16>, vector<32x128xbf16>, vector<16x128xf32> -> vector<16x128xf32>
    %c0_5 = arith.constant 0 : index
    %c0_6 = arith.constant 0 : index
    %8 = vector.load %arg4[%c0_5, %c0_6] : memref<1x128xf32, #tpu.memory_space<vmem>>, vector<1x128xf32>
    %9 = vector.broadcast %8 : vector<1x128xf32> to vector<16x128xf32>
    %10 = arith.addf %7, %9 : vector<16x128xf32>
    %11 = vector.shape_cast %10 : vector<16x128xf32> to vector<2x8x128xf32>
    %c0_7 = arith.constant 0 : index
    %c0_8 = arith.constant 0 : index
    %12 = vector.load %arg8[%c0_7, %c0_8] : memref<2x32xf32, #tpu.memory_space<vmem>>, vector<2x32xf32>
    %c0_9 = arith.constant 0 : index
    %c0_10 = arith.constant 0 : index
    %13 = vector.load %arg9[%c0_9, %c0_10] : memref<2x32xf32, #tpu.memory_space<vmem>>, vector<2x32xf32>
    %c0_11 = arith.constant 0 : index
    %c0_12 = arith.constant 0 : index
    %14 = vector.load %arg11[%c0_11, %c0_12] : memref<32x128xbf16, #tpu.memory_space<vmem>>, vector<32x128xbf16>
    %15 = vector.extract_strided_slice %11 {offsets = [0, 0, 0], sizes = [2, 1, 128], strides = [1, 1, 1]} : vector<2x8x128xf32> to vector<2x1x128xf32>
    %16 = vector.shape_cast %15 : vector<2x1x128xf32> to vector<2x128xf32>
    %17 = arith.truncf %12 : vector<2x32xf32> to vector<2x32xbf16>
    %cst_13 = arith.constant dense<0.000000e+00> : vector<2x128xf32>
    %18 = tpu.matmul %17, %14, %cst_13 {dimension_numbers = #tpu.dot_dimension_numbers<[1], [0], [0], [1], [0, 0, 1, 1], [], []>} : vector<2x32xbf16>, vector<32x128xbf16>, vector<2x128xf32> -> vector<2x128xf32>
    %19 = arith.addf %16, %18 : vector<2x128xf32>
    %20 = vector.extract_strided_slice %19 {offsets = [0, 0], sizes = [2, 32], strides = [1, 1]} : vector<2x128xf32> to vector<2x32xf32>
    %21 = arith.negf %20 : vector<2x32xf32>
    %22 = math.exp %21 : vector<2x32xf32>
    %cst_14 = arith.constant 1.000000e+00 : f32
    %23 = vector.broadcast %cst_14 : f32 to vector<2x32xf32>
    %24 = arith.addf %23, %22 : vector<2x32xf32>
    %25 = arith.divf %23, %24 : vector<2x32xf32>
    %26 = vector.extract_strided_slice %19 {offsets = [0, 32], sizes = [2, 32], strides = [1, 1]} : vector<2x128xf32> to vector<2x32xf32>
    %27 = arith.negf %26 : vector<2x32xf32>
    %28 = math.exp %27 : vector<2x32xf32>
    %cst_15 = arith.constant 1.000000e+00 : f32
    %29 = vector.broadcast %cst_15 : f32 to vector<2x32xf32>
    %30 = arith.addf %29, %28 : vector<2x32xf32>
    %31 = arith.divf %29, %30 : vector<2x32xf32>
    %32 = vector.extract_strided_slice %19 {offsets = [0, 64], sizes = [2, 32], strides = [1, 1]} : vector<2x128xf32> to vector<2x32xf32>
    %33 = math.tanh %32 : vector<2x32xf32>
    %34 = vector.extract_strided_slice %19 {offsets = [0, 96], sizes = [2, 32], strides = [1, 1]} : vector<2x128xf32> to vector<2x32xf32>
    %35 = arith.negf %34 : vector<2x32xf32>
    %36 = math.exp %35 : vector<2x32xf32>
    %cst_16 = arith.constant 1.000000e+00 : f32
    %37 = vector.broadcast %cst_16 : f32 to vector<2x32xf32>
    %38 = arith.addf %37, %36 : vector<2x32xf32>
    %39 = arith.divf %37, %38 : vector<2x32xf32>
    %40 = arith.mulf %31, %13 : vector<2x32xf32>
    %41 = arith.mulf %25, %33 : vector<2x32xf32>
    %42 = arith.addf %40, %41 : vector<2x32xf32>
    %43 = math.tanh %42 : vector<2x32xf32>
    %44 = arith.mulf %39, %43 : vector<2x32xf32>
    %45 = vector.extract_strided_slice %11 {offsets = [0, 1, 0], sizes = [2, 1, 128], strides = [1, 1, 1]} : vector<2x8x128xf32> to vector<2x1x128xf32>
    %46 = vector.shape_cast %45 : vector<2x1x128xf32> to vector<2x128xf32>
    %47 = arith.truncf %44 : vector<2x32xf32> to vector<2x32xbf16>
    %cst_17 = arith.constant dense<0.000000e+00> : vector<2x128xf32>
    %48 = tpu.matmul %47, %14, %cst_17 {dimension_numbers = #tpu.dot_dimension_numbers<[1], [0], [0], [1], [0, 0, 1, 1], [], []>} : vector<2x32xbf16>, vector<32x128xbf16>, vector<2x128xf32> -> vector<2x128xf32>
    %49 = arith.addf %46, %48 : vector<2x128xf32>
    %50 = vector.extract_strided_slice %49 {offsets = [0, 0], sizes = [2, 32], strides = [1, 1]} : vector<2x128xf32> to vector<2x32xf32>
    %51 = arith.negf %50 : vector<2x32xf32>
    %52 = math.exp %51 : vector<2x32xf32>
    %cst_18 = arith.constant 1.000000e+00 : f32
    %53 = vector.broadcast %cst_18 : f32 to vector<2x32xf32>
    %54 = arith.addf %53, %52 : vector<2x32xf32>
    %55 = arith.divf %53, %54 : vector<2x32xf32>
    %56 = vector.extract_strided_slice %49 {offsets = [0, 32], sizes = [2, 32], strides = [1, 1]} : vector<2x128xf32> to vector<2x32xf32>
    %57 = arith.negf %56 : vector<2x32xf32>
    %58 = math.exp %57 : vector<2x32xf32>
    %cst_19 = arith.constant 1.000000e+00 : f32
    %59 = vector.broadcast %cst_19 : f32 to vector<2x32xf32>
    %60 = arith.addf %59, %58 : vector<2x32xf32>
    %61 = arith.divf %59, %60 : vector<2x32xf32>
    %62 = vector.extract_strided_slice %49 {offsets = [0, 64], sizes = [2, 32], strides = [1, 1]} : vector<2x128xf32> to vector<2x32xf32>
    %63 = math.tanh %62 : vector<2x32xf32>
    %64 = vector.extract_strided_slice %49 {offsets = [0, 96], sizes = [2, 32], strides = [1, 1]} : vector<2x128xf32> to vector<2x32xf32>
    %65 = arith.negf %64 : vector<2x32xf32>
    %66 = math.exp %65 : vector<2x32xf32>
    %cst_20 = arith.constant 1.000000e+00 : f32
    %67 = vector.broadcast %cst_20 : f32 to vector<2x32xf32>
    %68 = arith.addf %67, %66 : vector<2x32xf32>
    %69 = arith.divf %67, %68 : vector<2x32xf32>
    %70 = arith.mulf %61, %42 : vector<2x32xf32>
    %71 = arith.mulf %55, %63 : vector<2x32xf32>
    %72 = arith.addf %70, %71 : vector<2x32xf32>
    %73 = math.tanh %72 : vector<2x32xf32>
    %74 = arith.mulf %69, %73 : vector<2x32xf32>
    %75 = vector.extract_strided_slice %11 {offsets = [0, 2, 0], sizes = [2, 1, 128], strides = [1, 1, 1]} : vector<2x8x128xf32> to vector<2x1x128xf32>
    %76 = vector.shape_cast %75 : vector<2x1x128xf32> to vector<2x128xf32>
    %77 = arith.truncf %74 : vector<2x32xf32> to vector<2x32xbf16>
    %cst_21 = arith.constant dense<0.000000e+00> : vector<2x128xf32>
    %78 = tpu.matmul %77, %14, %cst_21 {dimension_numbers = #tpu.dot_dimension_numbers<[1], [0], [0], [1], [0, 0, 1, 1], [], []>} : vector<2x32xbf16>, vector<32x128xbf16>, vector<2x128xf32> -> vector<2x128xf32>
    %79 = arith.addf %76, %78 : vector<2x128xf32>
    %80 = vector.extract_strided_slice %79 {offsets = [0, 0], sizes = [2, 32], strides = [1, 1]} : vector<2x128xf32> to vector<2x32xf32>
    %81 = arith.negf %80 : vector<2x32xf32>
    %82 = math.exp %81 : vector<2x32xf32>
    %cst_22 = arith.constant 1.000000e+00 : f32
    %83 = vector.broadcast %cst_22 : f32 to vector<2x32xf32>
    %84 = arith.addf %83, %82 : vector<2x32xf32>
    %85 = arith.divf %83, %84 : vector<2x32xf32>
    %86 = vector.extract_strided_slice %79 {offsets = [0, 32], sizes = [2, 32], strides = [1, 1]} : vector<2x128xf32> to vector<2x32xf32>
    %87 = arith.negf %86 : vector<2x32xf32>
    %88 = math.exp %87 : vector<2x32xf32>
    %cst_23 = arith.constant 1.000000e+00 : f32
    %89 = vector.broadcast %cst_23 : f32 to vector<2x32xf32>
    %90 = arith.addf %89, %88 : vector<2x32xf32>
    %91 = arith.divf %89, %90 : vector<2x32xf32>
    %92 = vector.extract_strided_slice %79 {offsets = [0, 64], sizes = [2, 32], strides = [1, 1]} : vector<2x128xf32> to vector<2x32xf32>
    %93 = math.tanh %92 : vector<2x32xf32>
    %94 = vector.extract_strided_slice %79 {offsets = [0, 96], sizes = [2, 32], strides = [1, 1]} : vector<2x128xf32> to vector<2x32xf32>
    %95 = arith.negf %94 : vector<2x32xf32>
    %96 = math.exp %95 : vector<2x32xf32>
    %cst_24 = arith.constant 1.000000e+00 : f32
    %97 = vector.broadcast %cst_24 : f32 to vector<2x32xf32>
    %98 = arith.addf %97, %96 : vector<2x32xf32>
    %99 = arith.divf %97, %98 : vector<2x32xf32>
    %100 = arith.mulf %91, %72 : vector<2x32xf32>
    %101 = arith.mulf %85, %93 : vector<2x32xf32>
    %102 = arith.addf %100, %101 : vector<2x32xf32>
    %103 = math.tanh %102 : vector<2x32xf32>
    %104 = arith.mulf %99, %103 : vector<2x32xf32>
    %105 = vector.extract_strided_slice %11 {offsets = [0, 3, 0], sizes = [2, 1, 128], strides = [1, 1, 1]} : vector<2x8x128xf32> to vector<2x1x128xf32>
    %106 = vector.shape_cast %105 : vector<2x1x128xf32> to vector<2x128xf32>
    %107 = arith.truncf %104 : vector<2x32xf32> to vector<2x32xbf16>
    %cst_25 = arith.constant dense<0.000000e+00> : vector<2x128xf32>
    %108 = tpu.matmul %107, %14, %cst_25 {dimension_numbers = #tpu.dot_dimension_numbers<[1], [0], [0], [1], [0, 0, 1, 1], [], []>} : vector<2x32xbf16>, vector<32x128xbf16>, vector<2x128xf32> -> vector<2x128xf32>
    %109 = arith.addf %106, %108 : vector<2x128xf32>
    %110 = vector.extract_strided_slice %109 {offsets = [0, 0], sizes = [2, 32], strides = [1, 1]} : vector<2x128xf32> to vector<2x32xf32>
    %111 = arith.negf %110 : vector<2x32xf32>
    %112 = math.exp %111 : vector<2x32xf32>
    %cst_26 = arith.constant 1.000000e+00 : f32
    %113 = vector.broadcast %cst_26 : f32 to vector<2x32xf32>
    %114 = arith.addf %113, %112 : vector<2x32xf32>
    %115 = arith.divf %113, %114 : vector<2x32xf32>
    %116 = vector.extract_strided_slice %109 {offsets = [0, 32], sizes = [2, 32], strides = [1, 1]} : vector<2x128xf32> to vector<2x32xf32>
    %117 = arith.negf %116 : vector<2x32xf32>
    %118 = math.exp %117 : vector<2x32xf32>
    %cst_27 = arith.constant 1.000000e+00 : f32
    %119 = vector.broadcast %cst_27 : f32 to vector<2x32xf32>
    %120 = arith.addf %119, %118 : vector<2x32xf32>
    %121 = arith.divf %119, %120 : vector<2x32xf32>
    %122 = vector.extract_strided_slice %109 {offsets = [0, 64], sizes = [2, 32], strides = [1, 1]} : vector<2x128xf32> to vector<2x32xf32>
    %123 = math.tanh %122 : vector<2x32xf32>
    %124 = vector.extract_strided_slice %109 {offsets = [0, 96], sizes = [2, 32], strides = [1, 1]} : vector<2x128xf32> to vector<2x32xf32>
    %125 = arith.negf %124 : vector<2x32xf32>
    %126 = math.exp %125 : vector<2x32xf32>
    %cst_28 = arith.constant 1.000000e+00 : f32
    %127 = vector.broadcast %cst_28 : f32 to vector<2x32xf32>
    %128 = arith.addf %127, %126 : vector<2x32xf32>
    %129 = arith.divf %127, %128 : vector<2x32xf32>
    %130 = arith.mulf %121, %102 : vector<2x32xf32>
    %131 = arith.mulf %115, %123 : vector<2x32xf32>
    %132 = arith.addf %130, %131 : vector<2x32xf32>
    %133 = math.tanh %132 : vector<2x32xf32>
    %134 = arith.mulf %129, %133 : vector<2x32xf32>
    %135 = vector.extract_strided_slice %11 {offsets = [0, 4, 0], sizes = [2, 1, 128], strides = [1, 1, 1]} : vector<2x8x128xf32> to vector<2x1x128xf32>
    %136 = vector.shape_cast %135 : vector<2x1x128xf32> to vector<2x128xf32>
    %137 = arith.truncf %134 : vector<2x32xf32> to vector<2x32xbf16>
    %cst_29 = arith.constant dense<0.000000e+00> : vector<2x128xf32>
    %138 = tpu.matmul %137, %14, %cst_29 {dimension_numbers = #tpu.dot_dimension_numbers<[1], [0], [0], [1], [0, 0, 1, 1], [], []>} : vector<2x32xbf16>, vector<32x128xbf16>, vector<2x128xf32> -> vector<2x128xf32>
    %139 = arith.addf %136, %138 : vector<2x128xf32>
    %140 = vector.extract_strided_slice %139 {offsets = [0, 0], sizes = [2, 32], strides = [1, 1]} : vector<2x128xf32> to vector<2x32xf32>
    %141 = arith.negf %140 : vector<2x32xf32>
    %142 = math.exp %141 : vector<2x32xf32>
    %cst_30 = arith.constant 1.000000e+00 : f32
    %143 = vector.broadcast %cst_30 : f32 to vector<2x32xf32>
    %144 = arith.addf %143, %142 : vector<2x32xf32>
    %145 = arith.divf %143, %144 : vector<2x32xf32>
    %146 = vector.extract_strided_slice %139 {offsets = [0, 32], sizes = [2, 32], strides = [1, 1]} : vector<2x128xf32> to vector<2x32xf32>
    %147 = arith.negf %146 : vector<2x32xf32>
    %148 = math.exp %147 : vector<2x32xf32>
    %cst_31 = arith.constant 1.000000e+00 : f32
    %149 = vector.broadcast %cst_31 : f32 to vector<2x32xf32>
    %150 = arith.addf %149, %148 : vector<2x32xf32>
    %151 = arith.divf %149, %150 : vector<2x32xf32>
    %152 = vector.extract_strided_slice %139 {offsets = [0, 64], sizes = [2, 32], strides = [1, 1]} : vector<2x128xf32> to vector<2x32xf32>
    %153 = math.tanh %152 : vector<2x32xf32>
    %154 = vector.extract_strided_slice %139 {offsets = [0, 96], sizes = [2, 32], strides = [1, 1]} : vector<2x128xf32> to vector<2x32xf32>
    %155 = arith.negf %154 : vector<2x32xf32>
    %156 = math.exp %155 : vector<2x32xf32>
    %cst_32 = arith.constant 1.000000e+00 : f32
    %157 = vector.broadcast %cst_32 : f32 to vector<2x32xf32>
    %158 = arith.addf %157, %156 : vector<2x32xf32>
    %159 = arith.divf %157, %158 : vector<2x32xf32>
    %160 = arith.mulf %151, %132 : vector<2x32xf32>
    %161 = arith.mulf %145, %153 : vector<2x32xf32>
    %162 = arith.addf %160, %161 : vector<2x32xf32>
    %163 = math.tanh %162 : vector<2x32xf32>
    %164 = arith.mulf %159, %163 : vector<2x32xf32>
    %165 = vector.extract_strided_slice %11 {offsets = [0, 5, 0], sizes = [2, 1, 128], strides = [1, 1, 1]} : vector<2x8x128xf32> to vector<2x1x128xf32>
    %166 = vector.shape_cast %165 : vector<2x1x128xf32> to vector<2x128xf32>
    %167 = arith.truncf %164 : vector<2x32xf32> to vector<2x32xbf16>
    %cst_33 = arith.constant dense<0.000000e+00> : vector<2x128xf32>
    %168 = tpu.matmul %167, %14, %cst_33 {dimension_numbers = #tpu.dot_dimension_numbers<[1], [0], [0], [1], [0, 0, 1, 1], [], []>} : vector<2x32xbf16>, vector<32x128xbf16>, vector<2x128xf32> -> vector<2x128xf32>
    %169 = arith.addf %166, %168 : vector<2x128xf32>
    %170 = vector.extract_strided_slice %169 {offsets = [0, 0], sizes = [2, 32], strides = [1, 1]} : vector<2x128xf32> to vector<2x32xf32>
    %171 = arith.negf %170 : vector<2x32xf32>
    %172 = math.exp %171 : vector<2x32xf32>
    %cst_34 = arith.constant 1.000000e+00 : f32
    %173 = vector.broadcast %cst_34 : f32 to vector<2x32xf32>
    %174 = arith.addf %173, %172 : vector<2x32xf32>
    %175 = arith.divf %173, %174 : vector<2x32xf32>
    %176 = vector.extract_strided_slice %169 {offsets = [0, 32], sizes = [2, 32], strides = [1, 1]} : vector<2x128xf32> to vector<2x32xf32>
    %177 = arith.negf %176 : vector<2x32xf32>
    %178 = math.exp %177 : vector<2x32xf32>
    %cst_35 = arith.constant 1.000000e+00 : f32
    %179 = vector.broadcast %cst_35 : f32 to vector<2x32xf32>
    %180 = arith.addf %179, %178 : vector<2x32xf32>
    %181 = arith.divf %179, %180 : vector<2x32xf32>
    %182 = vector.extract_strided_slice %169 {offsets = [0, 64], sizes = [2, 32], strides = [1, 1]} : vector<2x128xf32> to vector<2x32xf32>
    %183 = math.tanh %182 : vector<2x32xf32>
    %184 = vector.extract_strided_slice %169 {offsets = [0, 96], sizes = [2, 32], strides = [1, 1]} : vector<2x128xf32> to vector<2x32xf32>
    %185 = arith.negf %184 : vector<2x32xf32>
    %186 = math.exp %185 : vector<2x32xf32>
    %cst_36 = arith.constant 1.000000e+00 : f32
    %187 = vector.broadcast %cst_36 : f32 to vector<2x32xf32>
    %188 = arith.addf %187, %186 : vector<2x32xf32>
    %189 = arith.divf %187, %188 : vector<2x32xf32>
    %190 = arith.mulf %181, %162 : vector<2x32xf32>
    %191 = arith.mulf %175, %183 : vector<2x32xf32>
    %192 = arith.addf %190, %191 : vector<2x32xf32>
    %193 = math.tanh %192 : vector<2x32xf32>
    %194 = arith.mulf %189, %193 : vector<2x32xf32>
    %195 = vector.extract_strided_slice %11 {offsets = [0, 6, 0], sizes = [2, 1, 128], strides = [1, 1, 1]} : vector<2x8x128xf32> to vector<2x1x128xf32>
    %196 = vector.shape_cast %195 : vector<2x1x128xf32> to vector<2x128xf32>
    %197 = arith.truncf %194 : vector<2x32xf32> to vector<2x32xbf16>
    %cst_37 = arith.constant dense<0.000000e+00> : vector<2x128xf32>
    %198 = tpu.matmul %197, %14, %cst_37 {dimension_numbers = #tpu.dot_dimension_numbers<[1], [0], [0], [1], [0, 0, 1, 1], [], []>} : vector<2x32xbf16>, vector<32x128xbf16>, vector<2x128xf32> -> vector<2x128xf32>
    %199 = arith.addf %196, %198 : vector<2x128xf32>
    %200 = vector.extract_strided_slice %199 {offsets = [0, 0], sizes = [2, 32], strides = [1, 1]} : vector<2x128xf32> to vector<2x32xf32>
    %201 = arith.negf %200 : vector<2x32xf32>
    %202 = math.exp %201 : vector<2x32xf32>
    %cst_38 = arith.constant 1.000000e+00 : f32
    %203 = vector.broadcast %cst_38 : f32 to vector<2x32xf32>
    %204 = arith.addf %203, %202 : vector<2x32xf32>
    %205 = arith.divf %203, %204 : vector<2x32xf32>
    %206 = vector.extract_strided_slice %199 {offsets = [0, 32], sizes = [2, 32], strides = [1, 1]} : vector<2x128xf32> to vector<2x32xf32>
    %207 = arith.negf %206 : vector<2x32xf32>
    %208 = math.exp %207 : vector<2x32xf32>
    %cst_39 = arith.constant 1.000000e+00 : f32
    %209 = vector.broadcast %cst_39 : f32 to vector<2x32xf32>
    %210 = arith.addf %209, %208 : vector<2x32xf32>
    %211 = arith.divf %209, %210 : vector<2x32xf32>
    %212 = vector.extract_strided_slice %199 {offsets = [0, 64], sizes = [2, 32], strides = [1, 1]} : vector<2x128xf32> to vector<2x32xf32>
    %213 = math.tanh %212 : vector<2x32xf32>
    %214 = vector.extract_strided_slice %199 {offsets = [0, 96], sizes = [2, 32], strides = [1, 1]} : vector<2x128xf32> to vector<2x32xf32>
    %215 = arith.negf %214 : vector<2x32xf32>
    %216 = math.exp %215 : vector<2x32xf32>
    %cst_40 = arith.constant 1.000000e+00 : f32
    %217 = vector.broadcast %cst_40 : f32 to vector<2x32xf32>
    %218 = arith.addf %217, %216 : vector<2x32xf32>
    %219 = arith.divf %217, %218 : vector<2x32xf32>
    %220 = arith.mulf %211, %192 : vector<2x32xf32>
    %221 = arith.mulf %205, %213 : vector<2x32xf32>
    %222 = arith.addf %220, %221 : vector<2x32xf32>
    %223 = math.tanh %222 : vector<2x32xf32>
    %224 = arith.mulf %219, %223 : vector<2x32xf32>
    %225 = vector.extract_strided_slice %11 {offsets = [0, 7, 0], sizes = [2, 1, 128], strides = [1, 1, 1]} : vector<2x8x128xf32> to vector<2x1x128xf32>
    %226 = vector.shape_cast %225 : vector<2x1x128xf32> to vector<2x128xf32>
    %227 = arith.truncf %224 : vector<2x32xf32> to vector<2x32xbf16>
    %cst_41 = arith.constant dense<0.000000e+00> : vector<2x128xf32>
    %228 = tpu.matmul %227, %14, %cst_41 {dimension_numbers = #tpu.dot_dimension_numbers<[1], [0], [0], [1], [0, 0, 1, 1], [], []>} : vector<2x32xbf16>, vector<32x128xbf16>, vector<2x128xf32> -> vector<2x128xf32>
    %229 = arith.addf %226, %228 : vector<2x128xf32>
    %230 = vector.extract_strided_slice %229 {offsets = [0, 0], sizes = [2, 32], strides = [1, 1]} : vector<2x128xf32> to vector<2x32xf32>
    %231 = arith.negf %230 : vector<2x32xf32>
    %232 = math.exp %231 : vector<2x32xf32>
    %cst_42 = arith.constant 1.000000e+00 : f32
    %233 = vector.broadcast %cst_42 : f32 to vector<2x32xf32>
    %234 = arith.addf %233, %232 : vector<2x32xf32>
    %235 = arith.divf %233, %234 : vector<2x32xf32>
    %236 = vector.extract_strided_slice %229 {offsets = [0, 32], sizes = [2, 32], strides = [1, 1]} : vector<2x128xf32> to vector<2x32xf32>
    %237 = arith.negf %236 : vector<2x32xf32>
    %238 = math.exp %237 : vector<2x32xf32>
    %cst_43 = arith.constant 1.000000e+00 : f32
    %239 = vector.broadcast %cst_43 : f32 to vector<2x32xf32>
    %240 = arith.addf %239, %238 : vector<2x32xf32>
    %241 = arith.divf %239, %240 : vector<2x32xf32>
    %242 = vector.extract_strided_slice %229 {offsets = [0, 64], sizes = [2, 32], strides = [1, 1]} : vector<2x128xf32> to vector<2x32xf32>
    %243 = math.tanh %242 : vector<2x32xf32>
    %244 = vector.extract_strided_slice %229 {offsets = [0, 96], sizes = [2, 32], strides = [1, 1]} : vector<2x128xf32> to vector<2x32xf32>
    %245 = arith.negf %244 : vector<2x32xf32>
    %246 = math.exp %245 : vector<2x32xf32>
    %cst_44 = arith.constant 1.000000e+00 : f32
    %247 = vector.broadcast %cst_44 : f32 to vector<2x32xf32>
    %248 = arith.addf %247, %246 : vector<2x32xf32>
    %249 = arith.divf %247, %248 : vector<2x32xf32>
    %250 = arith.mulf %241, %222 : vector<2x32xf32>
    %251 = arith.mulf %235, %243 : vector<2x32xf32>
    %252 = arith.addf %250, %251 : vector<2x32xf32>
    %253 = math.tanh %252 : vector<2x32xf32>
    %254 = arith.mulf %249, %253 : vector<2x32xf32>
    %c0_45 = arith.constant 0 : index
    %c0_46 = arith.constant 0 : index
    %255 = vector.load %arg8[%c0_45, %c0_46] : memref<2x32xf32, #tpu.memory_space<vmem>>, vector<2x32xf32>
    tpu.vector_store %arg8[%c0_45, %c0_46], %254 {strides = array<i32>} : memref<2x32xf32, #tpu.memory_space<vmem>>, vector<2x32xf32>,
    %c0_47 = arith.constant 0 : index
    %c0_48 = arith.constant 0 : index
    %256 = vector.load %arg9[%c0_47, %c0_48] : memref<2x32xf32, #tpu.memory_space<vmem>>, vector<2x32xf32>
    tpu.vector_store %arg9[%c0_47, %c0_48], %252 {strides = array<i32>} : memref<2x32xf32, #tpu.memory_space<vmem>>, vector<2x32xf32>,
    %c0_i32_49 = arith.constant 0 : i32
    %257 = arith.cmpi eq, %arg0, %c0_i32_49 : i32
    %258 = arith.extui %257 : i1 to i32
    %c0_i32_50 = arith.constant 0 : i32
    %259 = arith.cmpi ne, %258, %c0_i32_50 : i32
    scf.if %259 {
      %260 = arith.truncf %254 : vector<2x32xf32> to vector<2x32xbf16>
      %c0_51 = arith.constant 0 : index
      %c0_52 = arith.constant 0 : index
      %261 = vector.load %arg5[%c0_51, %c0_52] : memref<32x4xbf16, #tpu.memory_space<vmem>>, vector<32x4xbf16>
      %cst_53 = arith.constant dense<0.000000e+00> : vector<2x4xf32>
      %262 = tpu.matmul %260, %261, %cst_53 {dimension_numbers = #tpu.dot_dimension_numbers<[1], [0], [0], [1], [0, 0, 1, 1], [], []>} : vector<2x32xbf16>, vector<32x4xbf16>, vector<2x4xf32> -> vector<2x4xf32>
      %c0_54 = arith.constant 0 : index
      %c0_55 = arith.constant 0 : index
      %263 = vector.load %arg6[%c0_54, %c0_55] : memref<1x4xf32, #tpu.memory_space<vmem>>, vector<1x4xf32>
      %264 = vector.broadcast %263 : vector<1x4xf32> to vector<2x4xf32>
      %265 = arith.addf %262, %264 : vector<2x4xf32>
      %c0_56 = arith.constant 0 : index
      %c0_57 = arith.constant 0 : index
      %266 = vector.load %arg7[%c0_56, %c0_57] : memref<2x4xf32, #tpu.memory_space<vmem>>, vector<2x4xf32>
      tpu.vector_store %arg7[%c0_56, %c0_57], %265 {strides = array<i32>} : memref<2x4xf32, #tpu.memory_space<vmem>>, vector<2x4xf32>,
    } else {
    }
    return
  }
  func.func @transform_0(%arg0: i32) -> (i32, i32, i32) {
    %c0_i32 = arith.constant 0 : i32
    %c0_i32_0 = arith.constant 0 : i32
    %c0_i32_1 = arith.constant 0 : i32
    return %c0_i32, %arg0, %c0_i32_0 : i32, i32, i32
  }
  func.func @transform_3(%arg0: i32) -> (i32, i32) {
    %c0_i32 = arith.constant 0 : i32
    %c0_i32_0 = arith.constant 0 : i32
    %c0_i32_1 = arith.constant 0 : i32
    return %c0_i32, %c0_i32_0 : i32, i32
  }
  func.func @transform_4(%arg0: i32) -> (i32, i32) {
    %c0_i32 = arith.constant 0 : i32
    %c0_i32_0 = arith.constant 0 : i32
    %c0_i32_1 = arith.constant 0 : i32
    return %c0_i32, %c0_i32_0 : i32, i32
  }
  func.func @transform_5(%arg0: i32) -> (i32, i32) {
    %c0_i32 = arith.constant 0 : i32
    %c0_i32_0 = arith.constant 0 : i32
    %c0_i32_1 = arith.constant 0 : i32
    return %c0_i32, %c0_i32_0 : i32, i32
  }
  func.func @transform_6(%arg0: i32) -> (i32, i32) {
    %c0_i32 = arith.constant 0 : i32
    %c0_i32_0 = arith.constant 0 : i32
    %c0_i32_1 = arith.constant 0 : i32
    return %c0_i32, %c0_i32_0 : i32, i32
  }
}

</mosaic_0001>

<llo_original>
// kernel: tpu_custom_call.1
$region0: #{tpu_custom_call.1}
  #allocation0 [shape = 'u32[]', space=smem, size = 0x4, offset = 0x4, fixed_abs, tag = 'smem constant byte address 0x4 - core index']
  #allocation1 [shape = 'u32[144,128]{1,0:T(1,128)}', space=vmem, size = 0x12000, scoped, tag = 'internal scratch']
  #allocation2 [shape = 'f32[2,32]{1,0:T(2,128)}', space=vmem, size = 0x400, scoped, tag = 'scratch operand']
  #allocation3 [shape = 'f32[2,32]{1,0:T(2,128)}', space=vmem, size = 0x400, scoped, tag = 'scratch operand']
  #allocation4 [shape = 'bf16[32,128]{1,0:T(16,128)(2,1)}', space=vmem, size = 0x2000, scoped, tag = 'scratch operand']
  #allocation5 [shape = 'bf16[32,128]{1,0:T(16,128)(2,1)}', space=vmem, size = 0x2000, scoped, tag = 'scratch operand']
  #allocation9 [shape = 's32[]', space=sflag, size = 0x4, offset = 0, fixed_abs, tag = 'sflag constant byte address 0x0 - dummy sync flag']
  #allocation10 [shape = 's32[]', space=sflag, size = 0x4, offset = 0, fixed_abs, tag = 'sflag constant byte address 0x0 - dummy sync flag']
  #allocation11 [shape = 'u32[]', space=smem, size = 0x4, offset = 0x44, fixed_abs, tag = 'smem constant byte address 0x44 - assertion arg 0']
  #allocation12 [shape = 'u32[]', space=smem, size = 0x4, offset = 0x48, fixed_abs, tag = 'smem constant byte address 0x48 - assertion arg 1']
  #allocation14 [shape = 's32[]', space=sflag, size = 0x4, offset = 0, fixed_abs, tag = 'sflag constant byte address 0x0 - dummy sync flag']
  #allocation15 [shape = 's32[]', space=sflag, size = 0x4, offset = 0, fixed_abs, tag = 'sflag constant byte address 0x0 - dummy sync flag']
  %s0 = inlined_call_operand.vmem [shape: f32[2,8,32], index: 0, kind: input, shape index: {}]
  %s1 = inlined_call_operand.hbm [shape: bf16[32,128], index: 1, kind: input, shape index: {}]
  %s2 = inlined_call_operand.hbm [shape: bf16[32,128], index: 2, kind: input, shape index: {}]
  %s3 = inlined_call_operand.vmem [shape: f32[1,128], index: 3, kind: input, shape index: {}]
  %s4 = inlined_call_operand.vmem [shape: bf16[32,4], index: 4, kind: input, shape index: {}]
  %s5 = inlined_call_operand.vmem [shape: f32[1,4], index: 5, kind: input, shape index: {}]
  %s6 = inlined_call_operand.hbm [shape: f32[2,4], index: 6, kind: output, shape index: {}]
  %s7 = sld [smem:[#allocation0]]
  $region44: #{tpu_custom_call.1} parent=0
    _
  %s9 = ssub.s32 1, %s7
  %s10 = scalar_select 0, %s9, %s7
  $region1: #{tpu_custom_call.1} parent=0
    #allocation6 [shape = 'u8[1024]{0}', space=vmem, size = 0x400, scoped, tag = 'output window, operand 0, single buffered']
    #allocation7 [shape = 's32[1]{0}', space=sflag, size = 0x4, scoped, tag = 'scoped memory for tpu_custom_call.1']
    %11 = vsyncpa [#allocation7], 0
    // Predicated region
    $region2: #{tpu_custom_call.1} parent=1 // pred_check
      _
    $region3: #{tpu_custom_call.1} parent=1 // pred_check_branch
      %13 = sbr.rel (0) target = $region5
    $region4: #{tpu_custom_call.1} parent=1 // pred_region
      _
    $region5: #{tpu_custom_call.1} parent=1 // pred_fallthru
      _
    // Predicated region
    $region6: #{tpu_custom_call.1} parent=1 // pred_check
      _
    $region7: #{tpu_custom_call.1} parent=1 // pred_check_branch
      %15 = sbr.rel (0) target = $region9
    $region8: #{tpu_custom_call.1} parent=1 // pred_region
      _
    $region9: #{tpu_custom_call.1} parent=1 // pred_fallthru
      _
    // Predicated region
    $region10: #{tpu_custom_call.1} parent=1 // pred_check
      _
    $region11: #{tpu_custom_call.1} parent=1 // pred_check_branch
      %17 = sbr.rel (0) target = $region13
    $region12: #{tpu_custom_call.1} parent=1 // pred_region
      _
    $region13: #{tpu_custom_call.1} parent=1 // pred_fallthru
      _
    // Predicated region
    $region14: #{tpu_custom_call.1} parent=1 // pred_check
      _
    $region15: #{tpu_custom_call.1} parent=1 // pred_check_branch
      %19 = sbr.rel (0) target = $region17
    $region16: #{tpu_custom_call.1} parent=1 // pred_region
      _
    $region17: #{tpu_custom_call.1} parent=1 // pred_fallthru
      _
    %p21 = scmp.eq.s32.totalorder 0, 0
    // Predicated region
    $region18: #{tpu_custom_call.1} parent=1 // pred_check
      %p22 = pneg %p21
    $region19: #{tpu_custom_call.1} parent=1 // pred_check_branch
      %24 = sbr.rel (%p22) target = $region21
    $region20: #{tpu_custom_call.1} parent=1 // pred_region
      $region22: #{tpu_custom_call.1} parent=20
        #allocation8 [shape = 's32[1]{0}', space=sflag, size = 0x4, scoped, tag = 'scoped memory for tpu_custom_call.1']
        // Predicated region
        $region23: #{tpu_custom_call.1} parent=22 // pred_check
          _
        $region24: #{tpu_custom_call.1} parent=22 // pred_check_branch
          %26 = sbr.rel target = $region26
        $region25: #{tpu_custom_call.1} parent=22 // pred_region
          %27 = sst [smem:[#allocation11]] [#allocation10]
          %28 = sst [smem:[#allocation12]] [#allocation9]
        $region26: #{tpu_custom_call.1} parent=22 // pred_fallthru
          _
        %30 = shalt.err (0)
        %s32 = sshll.u32 [#allocation4], 4
        %s33 = int_to_ptr.vmem [resolvable:$true] %s32
        %35 = dma.hbm_to_vmem [thread:$0]  %s1, 256, %s33, [#allocation8]
        %s36 = smul.u32 4, 4
        %s37 = smul.u32 %s36, 1
        %s38 = sshll.u32 %s37, 4
        %39 = dma.done [#allocation8], %s38
      $region27: #{tpu_custom_call.1} parent=20
        #allocation13 [shape = 's32[1]{0}', space=sflag, size = 0x4, scoped, tag = 'scoped memory for tpu_custom_call.1']
        // Predicated region
        $region28: #{tpu_custom_call.1} parent=27 // pred_check
          _
        $region29: #{tpu_custom_call.1} parent=27 // pred_check_branch
          %41 = sbr.rel target = $region31
        $region30: #{tpu_custom_call.1} parent=27 // pred_region
          %42 = sst [smem:[#allocation11]] [#allocation15]
          %43 = sst [smem:[#allocation12]] [#allocation14]
        $region31: #{tpu_custom_call.1} parent=27 // pred_fallthru
          _
        %45 = shalt.err (0)
        %s47 = sshll.u32 [#allocation5], 4
        %s48 = int_to_ptr.vmem [resolvable:$true] %s47
        %50 = dma.hbm_to_vmem [thread:$0]  %s2, 256, %s48, [#allocation13]
        %s51 = smul.u32 4, 4
        %s52 = smul.u32 %s51, 1
        %s53 = sshll.u32 %s52, 4
        %54 = dma.done [#allocation13], %s53
      %vm55 = vcmask 254976
      %56 = vst.msk [vmem:[#allocation2] sm:$0x3] %vm55, 0.0
      %57 = vst.msk [vmem:[#allocation3] sm:$0x3] %vm55, 0.0
    $region21: #{tpu_custom_call.1} parent=1 // pred_fallthru
      _
    %v58 = vld [vmem:[%s0] sm:$0xff]
    %v59 = vld [vmem:[%s0 + $0x8] sm:$0xff]
    %v60 = vpack.c.bf16 %v58, %v58
    %v61 = vpack.c.bf16 %v59, %v59
    %v62 = vld [vmem:[#allocation4] sm:$0xff]
    %v63 = vld [vmem:[#allocation4 + $0x8] sm:$0xff]
    %v64 = vld [vmem:[%s3] sm:$0x1]
    %v66 = vlaneseq
    %v67 = vshrl.u32 %v66, 7
    %v68 = vsub.s32 0, %v67
    %v69 = vrot.slane %v64, %v68
    %v73 = vunpack.c.l.b16 %v60
    %v74 = vunpack.c.l.b16 %v61
    %v75 = vpack.c.b16 %v74, %v73
    %vm76 = vcmask 261120
    %v78 = vsel %vm76, %v75, 0
    %80 = vmatprep.subr.bf16.mxu0 0
    %81 = vmatpush1.bf16.msra.mxu0 %v62
    %82 = vmatprep.subr.bf16.mxu0 0
    %83 = vmatpush1.bf16.msra.mxu0 %v63
    %84 = vmatprep.subr.bf16.mxu0 0
    %85 = vmatpush1.bf16.msra.mxu0 0
    %86 = vmatprep.subr.bf16.mxu0 0
    %87 = vmatpush1.bf16.msra.mxu0 0
    %88 = vmatprep.subr.bf16.mxu0 0
    %89 = vmatpush1.bf16.msra.mxu0 0
    %90 = vmatprep.subr.bf16.mxu0 0
    %91 = vmatpush1.bf16.msra.mxu0 0
    %92 = vmatprep.subr.bf16.mxu0 0
    %93 = vmatpush1.bf16.msra.mxu0 0
    %94 = vmatprep.subr.bf16.mxu0 0
    %95 = vmatpush1.bf16.msra.mxu0 0
    %96 = vmatprep.subr.bf16.mxu0 0
    %97 = vmatpush1.bf16.msra.mxu0 0
    %98 = vmatprep.subr.bf16.mxu0 0
    %99 = vmatpush1.bf16.msra.mxu0 0
    %100 = vmatprep.subr.bf16.mxu0 0
    %101 = vmatpush1.bf16.msra.mxu0 0
    %102 = vmatprep.subr.bf16.mxu0 0
    %103 = vmatpush1.bf16.msra.mxu0 0
    %104 = vmatprep.subr.bf16.mxu0 0
    %105 = vmatpush1.bf16.msra.mxu0 0
    %106 = vmatprep.subr.bf16.mxu0 0
    %107 = vmatpush1.bf16.msra.mxu0 0
    %108 = vmatprep.subr.bf16.mxu0 0
    %109 = vmatpush1.bf16.msra.mxu0 0
    %110 = vmatprep.subr.bf16.mxu0 0
    %111 = vmatpush1.bf16.msra.mxu0 0
    %112 = vmatprep.mubr.bf16.mxu0 0
    %113 = vmatmul.mubr.bf16.gmra.mrb[0].mxu0 %v78
    %v114 = vpop.f32.mrb[0].mxu0
    %v115 = vadd.f32 %v69, %v114
    %v116 = vpop.f32.mrb[0].mxu0
    %v117 = vpop.f32.mrb[0].mxu0
    %v118 = vadd.f32 %v69, %v117
    %v119 = vpop.f32.mrb[0].mxu0
    %120 = vdwg.mxu0
    %v121 = vld [vmem:[#allocation2] sm:$0x3]
    %v122 = vld [vmem:[#allocation3] sm:$0x3]
    %v123 = vld [vmem:[#allocation5] sm:$0xff]
    %v124 = vld [vmem:[#allocation5 + $0x8] sm:$0xff]
    %v125 = vpack.c.bf16 %v121, %v121
    %v127 = vsel %vm76, %v125, 0
    %129 = vmatprep.subr.bf16.mxu0 0
    %130 = vmatpush1.bf16.msra.mxu0 %v123
    %131 = vmatprep.subr.bf16.mxu0 0
    %132 = vmatpush1.bf16.msra.mxu0 %v124
    %133 = vmatprep.subr.bf16.mxu0 0
    %134 = vmatpush1.bf16.msra.mxu0 0
    %135 = vmatprep.subr.bf16.mxu0 0
    %136 = vmatpush1.bf16.msra.mxu0 0
    %137 = vmatprep.subr.bf16.mxu0 0
    %138 = vmatpush1.bf16.msra.mxu0 0
    %139 = vmatprep.subr.bf16.mxu0 0
    %140 = vmatpush1.bf16.msra.mxu0 0
    %141 = vmatprep.subr.bf16.mxu0 0
    %142 = vmatpush1.bf16.msra.mxu0 0
    %143 = vmatprep.subr.bf16.mxu0 0
    %144 = vmatpush1.bf16.msra.mxu0 0
    %145 = vmatprep.subr.bf16.mxu0 0
    %146 = vmatpush1.bf16.msra.mxu0 0
    %147 = vmatprep.subr.bf16.mxu0 0
    %148 = vmatpush1.bf16.msra.mxu0 0
    %149 = vmatprep.subr.bf16.mxu0 0
    %150 = vmatpush1.bf16.msra.mxu0 0
    %151 = vmatprep.subr.bf16.mxu0 0
    %152 = vmatpush1.bf16.msra.mxu0 0
    %153 = vmatprep.subr.bf16.mxu0 0
    %154 = vmatpush1.bf16.msra.mxu0 0
    %155 = vmatprep.subr.bf16.mxu0 0
    %156 = vmatpush1.bf16.msra.mxu0 0
    %157 = vmatprep.subr.bf16.mxu0 0
    %158 = vmatpush1.bf16.msra.mxu0 0
    %159 = vmatprep.subr.bf16.mxu0 0
    %160 = vmatpush1.bf16.msra.mxu0 0
    %161 = vmatprep.mubr.bf16.mxu0 0
    %162 = vmatmul.mubr.bf16.gmra.mrb[0].mxu0 %v127
    %v163 = vpop.f32.mrb[0].mxu0
    %v164 = vadd.f32 0.0, %v163
    %v165 = vpop.f32.mrb[0].mxu0
    %v166 = vpop.f32.mrb[0].mxu0
    %v167 = vpop.f32.mrb[0].mxu0
    %168 = vdwg.mxu0
    %v170 = vrot.slane %v164, 1
    %v173 = vadd.f32 %v115, %v164
    %v174 = vadd.f32 %v118, %v170
    %v175 = vxor.u32 %v173, 2147483648
    %v176 = vxor.u32 %v174, 2147483648
    %v177 = vmul.f32 %v175, 1.442695
    %v178 = vpow.pop %v177
    %v179 = vmul.f32 %v176, 1.442695
    %v180 = vpow.pop %v179
    %v181 = vadd.f32 %v178, 1.0
    %v182 = vadd.f32 %v180, 1.0
    %v183 = vrcp.pop %v181
    %v184 = vmul.f32 1.0, %v183
    %v185 = vrcp.pop %v182
    %v186 = vmul.f32 1.0, %v185
    %v187 = vtanh.pop %v173
    %v188 = vtanh.pop %v174
    %v190 = vrot.slane %v122, 1
    %191 = vrot.lane.b32.xlu0 %v122, 32
    %v192 = vpop.permute.xlu0 %191
    %193 = vrot.lane.b32.xlu0 %v190, 32
    %v194 = vpop.permute.xlu0 %193
    %v197 = vmul.f32 %v184, %v192
    %v198 = vmul.f32 %v186, %v194
    %201 = vrot.lane.b32.xlu0 %v187, 64
    %v202 = vpop.permute.xlu0 %201
    %203 = vrot.lane.b32.xlu0 %v188, 64
    %v204 = vpop.permute.xlu0 %203
    %v207 = vmul.f32 %v184, %v202
    %v208 = vmul.f32 %v186, %v204
    %211 = vrot.lane.b32.xlu0 %v207, 32
    %v212 = vpop.permute.xlu0 %211
    %213 = vrot.lane.b32.xlu0 %v208, 32
    %v214 = vpop.permute.xlu0 %213
    %v217 = vadd.f32 %v197, %v212
    %v218 = vadd.f32 %v198, %v214
    %v219 = vtanh.pop %v217
    %v220 = vtanh.pop %v218
    %223 = vrot.lane.b32.xlu0 %v219, 64
    %v224 = vpop.permute.xlu0 %223
    %225 = vrot.lane.b32.xlu0 %v220, 64
    %v226 = vpop.permute.xlu0 %225
    %v229 = vmul.f32 %v184, %v224
    %v230 = vmul.f32 %v186, %v226
    %v231 = vpack.c.bf16 %v229, %v229
    %v232 = vpack.c.bf16 %v230, %v230
    %v235 = vunpack.c.l.b16 %v231
    %v236 = vunpack.c.l.b16 %v232
    %v237 = vrot.slane %v236, 7
    %vm238 = vcmask 1041409
    %v239 = vsel %vm238, %v237, %v235
    %v240 = vpack.c.b16 %v239, %v239
    %241 = vrot.lane.b32.xlu0 %v240, 32
    %v242 = vpop.permute.xlu0 %241
    %v244 = vsel %vm76, %v242, 0
    %246 = vmatprep.subr.bf16.mxu0 0
    %247 = vmatpush1.bf16.msra.mxu0 %v123
    %248 = vmatprep.subr.bf16.mxu0 0
    %249 = vmatpush1.bf16.msra.mxu0 %v124
    %250 = vmatprep.subr.bf16.mxu0 0
    %251 = vmatpush1.bf16.msra.mxu0 0
    %252 = vmatprep.subr.bf16.mxu0 0
    %253 = vmatpush1.bf16.msra.mxu0 0
    %254 = vmatprep.subr.bf16.mxu0 0
    %255 = vmatpush1.bf16.msra.mxu0 0
    %256 = vmatprep.subr.bf16.mxu0 0
    %257 = vmatpush1.bf16.msra.mxu0 0
    %258 = vmatprep.subr.bf16.mxu0 0
    %259 = vmatpush1.bf16.msra.mxu0 0
    %260 = vmatprep.subr.bf16.mxu0 0
    %261 = vmatpush1.bf16.msra.mxu0 0
    %262 = vmatprep.subr.bf16.mxu0 0
    %263 = vmatpush1.bf16.msra.mxu0 0
    %264 = vmatprep.subr.bf16.mxu0 0
    %265 = vmatpush1.bf16.msra.mxu0 0
    %266 = vmatprep.subr.bf16.mxu0 0
    %267 = vmatpush1.bf16.msra.mxu0 0
    %268 = vmatprep.subr.bf16.mxu0 0
    %269 = vmatpush1.bf16.msra.mxu0 0
    %270 = vmatprep.subr.bf16.mxu0 0
    %271 = vmatpush1.bf16.msra.mxu0 0
    %272 = vmatprep.subr.bf16.mxu0 0
    %273 = vmatpush1.bf16.msra.mxu0 0
    %274 = vmatprep.subr.bf16.mxu0 0
    %275 = vmatpush1.bf16.msra.mxu0 0
    %276 = vmatprep.subr.bf16.mxu0 0
    %277 = vmatpush1.bf16.msra.mxu0 0
    %278 = vmatprep.mubr.bf16.mxu0 0
    %279 = vmatmul.mubr.bf16.gmra.mrb[0].mxu0 %v244
    %v280 = vpop.f32.mrb[0].mxu0
    %v281 = vadd.f32 0.0, %v280
    %v282 = vpop.f32.mrb[0].mxu0
    %v283 = vpop.f32.mrb[0].mxu0
    %v284 = vpop.f32.mrb[0].mxu0
    %285 = vdwg.mxu0
    %v287 = vrot.slane %v281, 7
    %v290 = vadd.f32 %v115, %v287
    %v291 = vadd.f32 %v118, %v281
    %v292 = vxor.u32 %v290, 2147483648
    %v293 = vxor.u32 %v291, 2147483648
    %v294 = vmul.f32 %v292, 1.442695
    %v295 = vpow.pop %v294
    %v296 = vmul.f32 %v293, 1.442695
    %v297 = vpow.pop %v296
    %v298 = vadd.f32 %v295, 1.0
    %v299 = vadd.f32 %v297, 1.0
    %v300 = vrcp.pop %v298
    %v301 = vmul.f32 1.0, %v300
    %v302 = vrcp.pop %v299
    %v303 = vmul.f32 1.0, %v302
    %v304 = vtanh.pop %v290
    %v305 = vtanh.pop %v291
    %v308 = vrot.slane %v217, 7
    %v309 = vrot.slane %v218, 7
    %v312 = vmul.f32 %v301, %v308
    %v313 = vmul.f32 %v303, %v309
    %316 = vrot.lane.b32.xlu0 %v304, 64
    %v317 = vpop.permute.xlu0 %316
    %318 = vrot.lane.b32.xlu0 %v305, 64
    %v319 = vpop.permute.xlu0 %318
    %v322 = vmul.f32 %v301, %v317
    %v323 = vmul.f32 %v303, %v319
    %326 = vrot.lane.b32.xlu0 %v322, 32
    %v327 = vpop.permute.xlu0 %326
    %328 = vrot.lane.b32.xlu0 %v323, 32
    %v329 = vpop.permute.xlu0 %328
    %v332 = vadd.f32 %v312, %v327
    %v333 = vadd.f32 %v313, %v329
    %v334 = vtanh.pop %v332
    %v335 = vtanh.pop %v333
    %338 = vrot.lane.b32.xlu0 %v334, 64
    %v339 = vpop.permute.xlu0 %338
    %340 = vrot.lane.b32.xlu0 %v335, 64
    %v341 = vpop.permute.xlu0 %340
    %v344 = vmul.f32 %v301, %v339
    %v345 = vmul.f32 %v303, %v341
    %v346 = vpack.c.bf16 %v344, %v344
    %v347 = vpack.c.bf16 %v345, %v345
    %v350 = vunpack.c.l.b16 %v346
    %v351 = vunpack.c.l.b16 %v347
    %v352 = vrot.slane %v350, 1
    %v353 = vsel %vm238, %v351, %v352
    %v354 = vpack.c.b16 %v353, %v353
    %355 = vrot.lane.b32.xlu0 %v354, 32
    %v356 = vpop.permute.xlu0 %355
    %v358 = vsel %vm76, %v356, 0
    %360 = vmatprep.subr.bf16.mxu0 0
    %361 = vmatpush1.bf16.msra.mxu0 %v123
    %362 = vmatprep.subr.bf16.mxu0 0
    %363 = vmatpush1.bf16.msra.mxu0 %v124
    %364 = vmatprep.subr.bf16.mxu0 0
    %365 = vmatpush1.bf16.msra.mxu0 0
    %366 = vmatprep.subr.bf16.mxu0 0
    %367 = vmatpush1.bf16.msra.mxu0 0
    %368 = vmatprep.subr.bf16.mxu0 0
    %369 = vmatpush1.bf16.msra.mxu0 0
    %370 = vmatprep.subr.bf16.mxu0 0
    %371 = vmatpush1.bf16.msra.mxu0 0
    %372 = vmatprep.subr.bf16.mxu0 0
    %373 = vmatpush1.bf16.msra.mxu0 0
    %374 = vmatprep.subr.bf16.mxu0 0
    %375 = vmatpush1.bf16.msra.mxu0 0
    %376 = vmatprep.subr.bf16.mxu0 0
    %377 = vmatpush1.bf16.msra.mxu0 0
    %378 = vmatprep.subr.bf16.mxu0 0
    %379 = vmatpush1.bf16.msra.mxu0 0
    %380 = vmatprep.subr.bf16.mxu0 0
    %381 = vmatpush1.bf16.msra.mxu0 0
    %382 = vmatprep.subr.bf16.mxu0 0
    %383 = vmatpush1.bf16.msra.mxu0 0
    %384 = vmatprep.subr.bf16.mxu0 0
    %385 = vmatpush1.bf16.msra.mxu0 0
    %386 = vmatprep.subr.bf16.mxu0 0
    %387 = vmatpush1.bf16.msra.mxu0 0
    %388 = vmatprep.subr.bf16.mxu0 0
    %389 = vmatpush1.bf16.msra.mxu0 0
    %390 = vmatprep.subr.bf16.mxu0 0
    %391 = vmatpush1.bf16.msra.mxu0 0
    %392 = vmatprep.mubr.bf16.mxu0 0
    %393 = vmatmul.mubr.bf16.gmra.mrb[0].mxu0 %v358
    %v394 = vpop.f32.mrb[0].mxu0
    %v395 = vadd.f32 0.0, %v394
    %v396 = vpop.f32.mrb[0].mxu0
    %v397 = vpop.f32.mrb[0].mxu0
    %v398 = vpop.f32.mrb[0].mxu0
    %399 = vdwg.mxu0
    %v401 = vrot.slane %v395, 6
    %v402 = vrot.slane %v395, 7
    %v405 = vadd.f32 %v115, %v401
    %v406 = vadd.f32 %v118, %v402
    %v407 = vxor.u32 %v405, 2147483648
    %v408 = vxor.u32 %v406, 2147483648
    %v409 = vmul.f32 %v407, 1.442695
    %v410 = vpow.pop %v409
    %v411 = vmul.f32 %v408, 1.442695
    %v412 = vpow.pop %v411
    %v413 = vadd.f32 %v410, 1.0
    %v414 = vadd.f32 %v412, 1.0
    %v415 = vrcp.pop %v413
    %v416 = vmul.f32 1.0, %v415
    %v417 = vrcp.pop %v414
    %v418 = vmul.f32 1.0, %v417
    %v419 = vtanh.pop %v405
    %v420 = vtanh.pop %v406
    %v423 = vrot.slane %v332, 7
    %v424 = vrot.slane %v333, 7
    %v427 = vmul.f32 %v416, %v423
    %v428 = vmul.f32 %v418, %v424
    %431 = vrot.lane.b32.xlu0 %v419, 64
    %v432 = vpop.permute.xlu0 %431
    %433 = vrot.lane.b32.xlu0 %v420, 64
    %v434 = vpop.permute.xlu0 %433
    %v437 = vmul.f32 %v416, %v432
    %v438 = vmul.f32 %v418, %v434
    %441 = vrot.lane.b32.xlu0 %v437, 32
    %v442 = vpop.permute.xlu0 %441
    %443 = vrot.lane.b32.xlu0 %v438, 32
    %v444 = vpop.permute.xlu0 %443
    %v447 = vadd.f32 %v427, %v442
    %v448 = vadd.f32 %v428, %v444
    %v449 = vtanh.pop %v447
    %v450 = vtanh.pop %v448
    %453 = vrot.lane.b32.xlu0 %v449, 64
    %v454 = vpop.permute.xlu0 %453
    %455 = vrot.lane.b32.xlu0 %v450, 64
    %v456 = vpop.permute.xlu0 %455
    %v459 = vmul.f32 %v416, %v454
    %v460 = vmul.f32 %v418, %v456
    %v461 = vpack.c.bf16 %v459, %v459
    %v462 = vpack.c.bf16 %v460, %v460
    %v465 = vunpack.c.l.b16 %v461
    %v466 = vunpack.c.l.b16 %v462
    %v467 = vrot.slane %v465, 2
    %v468 = vrot.slane %v466, 1
    %v469 = vsel %vm238, %v468, %v467
    %v470 = vpack.c.b16 %v469, %v469
    %471 = vrot.lane.b32.xlu0 %v470, 32
    %v472 = vpop.permute.xlu0 %471
    %v474 = vsel %vm76, %v472, 0
    %476 = vmatprep.subr.bf16.mxu0 0
    %477 = vmatpush1.bf16.msra.mxu0 %v123
    %478 = vmatprep.subr.bf16.mxu0 0
    %479 = vmatpush1.bf16.msra.mxu0 %v124
    %480 = vmatprep.subr.bf16.mxu0 0
    %481 = vmatpush1.bf16.msra.mxu0 0
    %482 = vmatprep.subr.bf16.mxu0 0
    %483 = vmatpush1.bf16.msra.mxu0 0
    %484 = vmatprep.subr.bf16.mxu0 0
    %485 = vmatpush1.bf16.msra.mxu0 0
    %486 = vmatprep.subr.bf16.mxu0 0
    %487 = vmatpush1.bf16.msra.mxu0 0
    %488 = vmatprep.subr.bf16.mxu0 0
    %489 = vmatpush1.bf16.msra.mxu0 0
    %490 = vmatprep.subr.bf16.mxu0 0
    %491 = vmatpush1.bf16.msra.mxu0 0
    %492 = vmatprep.subr.bf16.mxu0 0
    %493 = vmatpush1.bf16.msra.mxu0 0
    %494 = vmatprep.subr.bf16.mxu0 0
    %495 = vmatpush1.bf16.msra.mxu0 0
    %496 = vmatprep.subr.bf16.mxu0 0
    %497 = vmatpush1.bf16.msra.mxu0 0
    %498 = vmatprep.subr.bf16.mxu0 0
    %499 = vmatpush1.bf16.msra.mxu0 0
    %500 = vmatprep.subr.bf16.mxu0 0
    %501 = vmatpush1.bf16.msra.mxu0 0
    %502 = vmatprep.subr.bf16.mxu0 0
    %503 = vmatpush1.bf16.msra.mxu0 0
    %504 = vmatprep.subr.bf16.mxu0 0
    %505 = vmatpush1.bf16.msra.mxu0 0
    %506 = vmatprep.subr.bf16.mxu0 0
    %507 = vmatpush1.bf16.msra.mxu0 0
    %508 = vmatprep.mubr.bf16.mxu0 0
    %509 = vmatmul.mubr.bf16.gmra.mrb[0].mxu0 %v474
    %v510 = vpop.f32.mrb[0].mxu0
    %v511 = vadd.f32 0.0, %v510
    %v512 = vpop.f32.mrb[0].mxu0
    %v513 = vpop.f32.mrb[0].mxu0
    %v514 = vpop.f32.mrb[0].mxu0
    %515 = vdwg.mxu0
    %v517 = vrot.slane %v511, 5
    %v518 = vrot.slane %v511, 6
    %v521 = vadd.f32 %v115, %v517
    %v522 = vadd.f32 %v118, %v518
    %v523 = vxor.u32 %v521, 2147483648
    %v524 = vxor.u32 %v522, 2147483648
    %v525 = vmul.f32 %v523, 1.442695
    %v526 = vpow.pop %v525
    %v527 = vmul.f32 %v524, 1.442695
    %v528 = vpow.pop %v527
    %v529 = vadd.f32 %v526, 1.0
    %v530 = vadd.f32 %v528, 1.0
    %v531 = vrcp.pop %v529
    %v532 = vmul.f32 1.0, %v531
    %v533 = vrcp.pop %v530
    %v534 = vmul.f32 1.0, %v533
    %v535 = vtanh.pop %v521
    %v536 = vtanh.pop %v522
    %v539 = vrot.slane %v447, 7
    %v540 = vrot.slane %v448, 7
    %v543 = vmul.f32 %v532, %v539
    %v544 = vmul.f32 %v534, %v540
    %547 = vrot.lane.b32.xlu0 %v535, 64
    %v548 = vpop.permute.xlu0 %547
    %549 = vrot.lane.b32.xlu0 %v536, 64
    %v550 = vpop.permute.xlu0 %549
    %v553 = vmul.f32 %v532, %v548
    %v554 = vmul.f32 %v534, %v550
    %557 = vrot.lane.b32.xlu0 %v553, 32
    %v558 = vpop.permute.xlu0 %557
    %559 = vrot.lane.b32.xlu0 %v554, 32
    %v560 = vpop.permute.xlu0 %559
    %v563 = vadd.f32 %v543, %v558
    %v564 = vadd.f32 %v544, %v560
    %v565 = vtanh.pop %v563
    %v566 = vtanh.pop %v564
    %569 = vrot.lane.b32.xlu0 %v565, 64
    %v570 = vpop.permute.xlu0 %569
    %571 = vrot.lane.b32.xlu0 %v566, 64
    %v572 = vpop.permute.xlu0 %571
    %v575 = vmul.f32 %v532, %v570
    %v576 = vmul.f32 %v534, %v572
    %v577 = vpack.c.bf16 %v575, %v575
    %v578 = vpack.c.bf16 %v576, %v576
    %v581 = vunpack.c.l.b16 %v577
    %v582 = vunpack.c.l.b16 %v578
    %v583 = vrot.slane %v581, 3
    %v584 = vrot.slane %v582, 2
    %v585 = vsel %vm238, %v584, %v583
    %v586 = vpack.c.b16 %v585, %v585
    %587 = vrot.lane.b32.xlu0 %v586, 32
    %v588 = vpop.permute.xlu0 %587
    %v590 = vsel %vm76, %v588, 0
    %592 = vmatprep.subr.bf16.mxu0 0
    %593 = vmatpush1.bf16.msra.mxu0 %v123
    %594 = vmatprep.subr.bf16.mxu0 0
    %595 = vmatpush1.bf16.msra.mxu0 %v124
    %596 = vmatprep.subr.bf16.mxu0 0
    %597 = vmatpush1.bf16.msra.mxu0 0
    %598 = vmatprep.subr.bf16.mxu0 0
    %599 = vmatpush1.bf16.msra.mxu0 0
    %600 = vmatprep.subr.bf16.mxu0 0
    %601 = vmatpush1.bf16.msra.mxu0 0
    %602 = vmatprep.subr.bf16.mxu0 0
    %603 = vmatpush1.bf16.msra.mxu0 0
    %604 = vmatprep.subr.bf16.mxu0 0
    %605 = vmatpush1.bf16.msra.mxu0 0
    %606 = vmatprep.subr.bf16.mxu0 0
    %607 = vmatpush1.bf16.msra.mxu0 0
    %608 = vmatprep.subr.bf16.mxu0 0
    %609 = vmatpush1.bf16.msra.mxu0 0
    %610 = vmatprep.subr.bf16.mxu0 0
    %611 = vmatpush1.bf16.msra.mxu0 0
    %612 = vmatprep.subr.bf16.mxu0 0
    %613 = vmatpush1.bf16.msra.mxu0 0
    %614 = vmatprep.subr.bf16.mxu0 0
    %615 = vmatpush1.bf16.msra.mxu0 0
    %616 = vmatprep.subr.bf16.mxu0 0
    %617 = vmatpush1.bf16.msra.mxu0 0
    %618 = vmatprep.subr.bf16.mxu0 0
    %619 = vmatpush1.bf16.msra.mxu0 0
    %620 = vmatprep.subr.bf16.mxu0 0
    %621 = vmatpush1.bf16.msra.mxu0 0
    %622 = vmatprep.subr.bf16.mxu0 0
    %623 = vmatpush1.bf16.msra.mxu0 0
    %624 = vmatprep.mubr.bf16.mxu0 0
    %625 = vmatmul.mubr.bf16.gmra.mrb[0].mxu0 %v590
    %v626 = vpop.f32.mrb[0].mxu0
    %v627 = vadd.f32 0.0, %v626
    %v628 = vpop.f32.mrb[0].mxu0
    %v629 = vpop.f32.mrb[0].mxu0
    %v630 = vpop.f32.mrb[0].mxu0
    %631 = vdwg.mxu0
    %v633 = vrot.slane %v627, 4
    %v634 = vrot.slane %v627, 5
    %v637 = vadd.f32 %v115, %v633
    %v638 = vadd.f32 %v118, %v634
    %v639 = vxor.u32 %v637, 2147483648
    %v640 = vxor.u32 %v638, 2147483648
    %v641 = vmul.f32 %v639, 1.442695
    %v642 = vpow.pop %v641
    %v643 = vmul.f32 %v640, 1.442695
    %v644 = vpow.pop %v643
    %v645 = vadd.f32 %v642, 1.0
    %v646 = vadd.f32 %v644, 1.0
    %v647 = vrcp.pop %v645
    %v648 = vmul.f32 1.0, %v647
    %v649 = vrcp.pop %v646
    %v650 = vmul.f32 1.0, %v649
    %v651 = vtanh.pop %v637
    %v652 = vtanh.pop %v638
    %v655 = vrot.slane %v563, 7
    %v656 = vrot.slane %v564, 7
    %v659 = vmul.f32 %v648, %v655
    %v660 = vmul.f32 %v650, %v656
    %663 = vrot.lane.b32.xlu0 %v651, 64
    %v664 = vpop.permute.xlu0 %663
    %665 = vrot.lane.b32.xlu0 %v652, 64
    %v666 = vpop.permute.xlu0 %665
    %v669 = vmul.f32 %v648, %v664
    %v670 = vmul.f32 %v650, %v666
    %673 = vrot.lane.b32.xlu0 %v669, 32
    %v674 = vpop.permute.xlu0 %673
    %675 = vrot.lane.b32.xlu0 %v670, 32
    %v676 = vpop.permute.xlu0 %675
    %v679 = vadd.f32 %v659, %v674
    %v680 = vadd.f32 %v660, %v676
    %v681 = vtanh.pop %v679
    %v682 = vtanh.pop %v680
    %685 = vrot.lane.b32.xlu0 %v681, 64
    %v686 = vpop.permute.xlu0 %685
    %687 = vrot.lane.b32.xlu0 %v682, 64
    %v688 = vpop.permute.xlu0 %687
    %v691 = vmul.f32 %v648, %v686
    %v692 = vmul.f32 %v650, %v688
    %v693 = vpack.c.bf16 %v691, %v691
    %v694 = vpack.c.bf16 %v692, %v692
    %v697 = vunpack.c.l.b16 %v693
    %v698 = vunpack.c.l.b16 %v694
    %v699 = vrot.slane %v697, 4
    %v700 = vrot.slane %v698, 3
    %v701 = vsel %vm238, %v700, %v699
    %v702 = vpack.c.b16 %v701, %v701
    %703 = vrot.lane.b32.xlu0 %v702, 32
    %v704 = vpop.permute.xlu0 %703
    %v706 = vsel %vm76, %v704, 0
    %708 = vmatprep.subr.bf16.mxu0 0
    %709 = vmatpush1.bf16.msra.mxu0 %v123
    %710 = vmatprep.subr.bf16.mxu0 0
    %711 = vmatpush1.bf16.msra.mxu0 %v124
    %712 = vmatprep.subr.bf16.mxu0 0
    %713 = vmatpush1.bf16.msra.mxu0 0
    %714 = vmatprep.subr.bf16.mxu0 0
    %715 = vmatpush1.bf16.msra.mxu0 0
    %716 = vmatprep.subr.bf16.mxu0 0
    %717 = vmatpush1.bf16.msra.mxu0 0
    %718 = vmatprep.subr.bf16.mxu0 0
    %719 = vmatpush1.bf16.msra.mxu0 0
    %720 = vmatprep.subr.bf16.mxu0 0
    %721 = vmatpush1.bf16.msra.mxu0 0
    %722 = vmatprep.subr.bf16.mxu0 0
    %723 = vmatpush1.bf16.msra.mxu0 0
    %724 = vmatprep.subr.bf16.mxu0 0
    %725 = vmatpush1.bf16.msra.mxu0 0
    %726 = vmatprep.subr.bf16.mxu0 0
    %727 = vmatpush1.bf16.msra.mxu0 0
    %728 = vmatprep.subr.bf16.mxu0 0
    %729 = vmatpush1.bf16.msra.mxu0 0
    %730 = vmatprep.subr.bf16.mxu0 0
    %731 = vmatpush1.bf16.msra.mxu0 0
    %732 = vmatprep.subr.bf16.mxu0 0
    %733 = vmatpush1.bf16.msra.mxu0 0
    %734 = vmatprep.subr.bf16.mxu0 0
    %735 = vmatpush1.bf16.msra.mxu0 0
    %736 = vmatprep.subr.bf16.mxu0 0
    %737 = vmatpush1.bf16.msra.mxu0 0
    %738 = vmatprep.subr.bf16.mxu0 0
    %739 = vmatpush1.bf16.msra.mxu0 0
    %740 = vmatprep.mubr.bf16.mxu0 0
    %741 = vmatmul.mubr.bf16.gmra.mrb[0].mxu0 %v706
    %v742 = vpop.f32.mrb[0].mxu0
    %v743 = vadd.f32 0.0, %v742
    %v744 = vpop.f32.mrb[0].mxu0
    %v745 = vpop.f32.mrb[0].mxu0
    %v746 = vpop.f32.mrb[0].mxu0
    %747 = vdwg.mxu0
    %v749 = vrot.slane %v743, 3
    %v750 = vrot.slane %v743, 4
    %v753 = vadd.f32 %v115, %v749
    %v754 = vadd.f32 %v118, %v750
    %v755 = vxor.u32 %v753, 2147483648
    %v756 = vxor.u32 %v754, 2147483648
    %v757 = vmul.f32 %v755, 1.442695
    %v758 = vpow.pop %v757
    %v759 = vmul.f32 %v756, 1.442695
    %v760 = vpow.pop %v759
    %v761 = vadd.f32 %v758, 1.0
    %v762 = vadd.f32 %v760, 1.0
    %v763 = vrcp.pop %v761
    %v764 = vmul.f32 1.0, %v763
    %v765 = vrcp.pop %v762
    %v766 = vmul.f32 1.0, %v765
    %v767 = vtanh.pop %v753
    %v768 = vtanh.pop %v754
    %v771 = vrot.slane %v679, 7
    %v772 = vrot.slane %v680, 7
    %v775 = vmul.f32 %v764, %v771
    %v776 = vmul.f32 %v766, %v772
    %779 = vrot.lane.b32.xlu0 %v767, 64
    %v780 = vpop.permute.xlu0 %779
    %781 = vrot.lane.b32.xlu0 %v768, 64
    %v782 = vpop.permute.xlu0 %781
    %v785 = vmul.f32 %v764, %v780
    %v786 = vmul.f32 %v766, %v782
    %789 = vrot.lane.b32.xlu0 %v785, 32
    %v790 = vpop.permute.xlu0 %789
    %791 = vrot.lane.b32.xlu0 %v786, 32
    %v792 = vpop.permute.xlu0 %791
    %v795 = vadd.f32 %v775, %v790
    %v796 = vadd.f32 %v776, %v792
    %v797 = vtanh.pop %v795
    %v798 = vtanh.pop %v796
    %801 = vrot.lane.b32.xlu0 %v797, 64
    %v802 = vpop.permute.xlu0 %801
    %803 = vrot.lane.b32.xlu0 %v798, 64
    %v804 = vpop.permute.xlu0 %803
    %v807 = vmul.f32 %v764, %v802
    %v808 = vmul.f32 %v766, %v804
    %v809 = vpack.c.bf16 %v807, %v807
    %v810 = vpack.c.bf16 %v808, %v808
    %v813 = vunpack.c.l.b16 %v809
    %v814 = vunpack.c.l.b16 %v810
    %v815 = vrot.slane %v813, 5
    %v816 = vrot.slane %v814, 4
    %v817 = vsel %vm238, %v816, %v815
    %v818 = vpack.c.b16 %v817, %v817
    %819 = vrot.lane.b32.xlu0 %v818, 32
    %v820 = vpop.permute.xlu0 %819
    %v822 = vsel %vm76, %v820, 0
    %824 = vmatprep.subr.bf16.mxu0 0
    %825 = vmatpush1.bf16.msra.mxu0 %v123
    %826 = vmatprep.subr.bf16.mxu0 0
    %827 = vmatpush1.bf16.msra.mxu0 %v124
    %828 = vmatprep.subr.bf16.mxu0 0
    %829 = vmatpush1.bf16.msra.mxu0 0
    %830 = vmatprep.subr.bf16.mxu0 0
    %831 = vmatpush1.bf16.msra.mxu0 0
    %832 = vmatprep.subr.bf16.mxu0 0
    %833 = vmatpush1.bf16.msra.mxu0 0
    %834 = vmatprep.subr.bf16.mxu0 0
    %835 = vmatpush1.bf16.msra.mxu0 0
    %836 = vmatprep.subr.bf16.mxu0 0
    %837 = vmatpush1.bf16.msra.mxu0 0
    %838 = vmatprep.subr.bf16.mxu0 0
    %839 = vmatpush1.bf16.msra.mxu0 0
    %840 = vmatprep.subr.bf16.mxu0 0
    %841 = vmatpush1.bf16.msra.mxu0 0
    %842 = vmatprep.subr.bf16.mxu0 0
    %843 = vmatpush1.bf16.msra.mxu0 0
    %844 = vmatprep.subr.bf16.mxu0 0
    %845 = vmatpush1.bf16.msra.mxu0 0
    %846 = vmatprep.subr.bf16.mxu0 0
    %847 = vmatpush1.bf16.msra.mxu0 0
    %848 = vmatprep.subr.bf16.mxu0 0
    %849 = vmatpush1.bf16.msra.mxu0 0
    %850 = vmatprep.subr.bf16.mxu0 0
    %851 = vmatpush1.bf16.msra.mxu0 0
    %852 = vmatprep.subr.bf16.mxu0 0
    %853 = vmatpush1.bf16.msra.mxu0 0
    %854 = vmatprep.subr.bf16.mxu0 0
    %855 = vmatpush1.bf16.msra.mxu0 0
    %856 = vmatprep.mubr.bf16.mxu0 0
    %857 = vmatmul.mubr.bf16.gmra.mrb[0].mxu0 %v822
    %v858 = vpop.f32.mrb[0].mxu0
    %v859 = vadd.f32 0.0, %v858
    %v860 = vpop.f32.mrb[0].mxu0
    %v861 = vpop.f32.mrb[0].mxu0
    %v862 = vpop.f32.mrb[0].mxu0
    %863 = vdwg.mxu0
    %v865 = vrot.slane %v859, 2
    %v866 = vrot.slane %v859, 3
    %v869 = vadd.f32 %v115, %v865
    %v870 = vadd.f32 %v118, %v866
    %v871 = vxor.u32 %v869, 2147483648
    %v872 = vxor.u32 %v870, 2147483648
    %v873 = vmul.f32 %v871, 1.442695
    %v874 = vpow.pop %v873
    %v875 = vmul.f32 %v872, 1.442695
    %v876 = vpow.pop %v875
    %v877 = vadd.f32 %v874, 1.0
    %v878 = vadd.f32 %v876, 1.0
    %v879 = vrcp.pop %v877
    %v880 = vmul.f32 1.0, %v879
    %v881 = vrcp.pop %v878
    %v882 = vmul.f32 1.0, %v881
    %v883 = vtanh.pop %v869
    %v884 = vtanh.pop %v870
    %v887 = vrot.slane %v795, 7
    %v888 = vrot.slane %v796, 7
    %v891 = vmul.f32 %v880, %v887
    %v892 = vmul.f32 %v882, %v888
    %895 = vrot.lane.b32.xlu0 %v883, 64
    %v896 = vpop.permute.xlu0 %895
    %897 = vrot.lane.b32.xlu0 %v884, 64
    %v898 = vpop.permute.xlu0 %897
    %v901 = vmul.f32 %v880, %v896
    %v902 = vmul.f32 %v882, %v898
    %905 = vrot.lane.b32.xlu0 %v901, 32
    %v906 = vpop.permute.xlu0 %905
    %907 = vrot.lane.b32.xlu0 %v902, 32
    %v908 = vpop.permute.xlu0 %907
    %v911 = vadd.f32 %v891, %v906
    %v912 = vadd.f32 %v892, %v908
    %v913 = vtanh.pop %v911
    %v914 = vtanh.pop %v912
    %917 = vrot.lane.b32.xlu0 %v913, 64
    %v918 = vpop.permute.xlu0 %917
    %919 = vrot.lane.b32.xlu0 %v914, 64
    %v920 = vpop.permute.xlu0 %919
    %v923 = vmul.f32 %v880, %v918
    %v924 = vmul.f32 %v882, %v920
    %v925 = vpack.c.bf16 %v923, %v923
    %v926 = vpack.c.bf16 %v924, %v924
    %v929 = vunpack.c.l.b16 %v925
    %v930 = vunpack.c.l.b16 %v926
    %v931 = vrot.slane %v929, 6
    %v932 = vrot.slane %v930, 5
    %v933 = vsel %vm238, %v932, %v931
    %v934 = vpack.c.b16 %v933, %v933
    %935 = vrot.lane.b32.xlu0 %v934, 32
    %v936 = vpop.permute.xlu0 %935
    %v938 = vsel %vm76, %v936, 0
    %940 = vmatprep.subr.bf16.mxu0 0
    %941 = vmatpush1.bf16.msra.mxu0 %v123
    %942 = vmatprep.subr.bf16.mxu0 0
    %943 = vmatpush1.bf16.msra.mxu0 %v124
    %944 = vmatprep.subr.bf16.mxu0 0
    %945 = vmatpush1.bf16.msra.mxu0 0
    %946 = vmatprep.subr.bf16.mxu0 0
    %947 = vmatpush1.bf16.msra.mxu0 0
    %948 = vmatprep.subr.bf16.mxu0 0
    %949 = vmatpush1.bf16.msra.mxu0 0
    %950 = vmatprep.subr.bf16.mxu0 0
    %951 = vmatpush1.bf16.msra.mxu0 0
    %952 = vmatprep.subr.bf16.mxu0 0
    %953 = vmatpush1.bf16.msra.mxu0 0
    %954 = vmatprep.subr.bf16.mxu0 0
    %955 = vmatpush1.bf16.msra.mxu0 0
    %956 = vmatprep.subr.bf16.mxu0 0
    %957 = vmatpush1.bf16.msra.mxu0 0
    %958 = vmatprep.subr.bf16.mxu0 0
    %959 = vmatpush1.bf16.msra.mxu0 0
    %960 = vmatprep.subr.bf16.mxu0 0
    %961 = vmatpush1.bf16.msra.mxu0 0
    %962 = vmatprep.subr.bf16.mxu0 0
    %963 = vmatpush1.bf16.msra.mxu0 0
    %964 = vmatprep.subr.bf16.mxu0 0
    %965 = vmatpush1.bf16.msra.mxu0 0
    %966 = vmatprep.subr.bf16.mxu0 0
    %967 = vmatpush1.bf16.msra.mxu0 0
    %968 = vmatprep.subr.bf16.mxu0 0
    %969 = vmatpush1.bf16.msra.mxu0 0
    %970 = vmatprep.subr.bf16.mxu0 0
    %971 = vmatpush1.bf16.msra.mxu0 0
    %972 = vmatprep.mubr.bf16.mxu0 0
    %973 = vmatmul.mubr.bf16.gmra.mrb[0].mxu0 %v938
    %v974 = vpop.f32.mrb[0].mxu0
    %v975 = vadd.f32 0.0, %v974
    %v976 = vpop.f32.mrb[0].mxu0
    %v977 = vpop.f32.mrb[0].mxu0
    %v978 = vpop.f32.mrb[0].mxu0
    %979 = vdwg.mxu0
    %v981 = vrot.slane %v975, 1
    %v982 = vrot.slane %v975, 2
    %v985 = vadd.f32 %v115, %v981
    %v986 = vadd.f32 %v118, %v982
    %v987 = vxor.u32 %v985, 2147483648
    %v988 = vxor.u32 %v986, 2147483648
    %v989 = vmul.f32 %v987, 1.442695
    %v990 = vpow.pop %v989
    %v991 = vmul.f32 %v988, 1.442695
    %v992 = vpow.pop %v991
    %v993 = vadd.f32 %v990, 1.0
    %v994 = vadd.f32 %v992, 1.0
    %v995 = vrcp.pop %v993
    %v996 = vmul.f32 1.0, %v995
    %v997 = vrcp.pop %v994
    %v998 = vmul.f32 1.0, %v997
    %v999 = vtanh.pop %v985
    %v1000 = vtanh.pop %v986
    %v1003 = vrot.slane %v911, 7
    %v1004 = vrot.slane %v912, 7
    %v1007 = vmul.f32 %v996, %v1003
    %v1008 = vmul.f32 %v998, %v1004
    %1011 = vrot.lane.b32.xlu0 %v999, 64
    %v1012 = vpop.permute.xlu0 %1011
    %1013 = vrot.lane.b32.xlu0 %v1000, 64
    %v1014 = vpop.permute.xlu0 %1013
    %v1017 = vmul.f32 %v996, %v1012
    %v1018 = vmul.f32 %v998, %v1014
    %1021 = vrot.lane.b32.xlu0 %v1017, 32
    %v1022 = vpop.permute.xlu0 %1021
    %1023 = vrot.lane.b32.xlu0 %v1018, 32
    %v1024 = vpop.permute.xlu0 %1023
    %v1027 = vadd.f32 %v1007, %v1022
    %v1028 = vadd.f32 %v1008, %v1024
    %v1029 = vtanh.pop %v1027
    %v1030 = vtanh.pop %v1028
    %1033 = vrot.lane.b32.xlu0 %v1029, 64
    %v1034 = vpop.permute.xlu0 %1033
    %1035 = vrot.lane.b32.xlu0 %v1030, 64
    %v1036 = vpop.permute.xlu0 %1035
    %v1039 = vmul.f32 %v996, %v1034
    %v1040 = vmul.f32 %v998, %v1036
    %v1043 = vrot.slane %v1040, 7
    %1044 = vrot.lane.b32.xlu0 %v1039, 32
    %v1045 = vpop.permute.xlu0 %1044
    %1046 = vrot.lane.b32.xlu0 %v1043, 32
    %v1047 = vpop.permute.xlu0 %1046
    %vm1050 = vcmask 261127
    %1051 = vst.msk [vmem:[#allocation2 - $0x7] sm:$0x80] %vm1050, %v1045
    %vm1052 = vcmask 253952
    %1053 = vst.msk [vmem:[#allocation2 + $0x1] sm:$0x1] %vm1052, %v1047
    %v1056 = vrot.slane %v1028, 7
    %1057 = vrot.lane.b32.xlu0 %v1027, 96
    %v1058 = vpop.permute.xlu0 %1057
    %1059 = vrot.lane.b32.xlu0 %v1056, 96
    %v1060 = vpop.permute.xlu0 %1059
    %1063 = vst.msk [vmem:[#allocation3 - $0x7] sm:$0x80] %vm1050, %v1058
    %1064 = vst.msk [vmem:[#allocation3 + $0x1] sm:$0x1] %vm1052, %v1060
    // Predicated region
    $region32: #{tpu_custom_call.1} parent=1 // pred_check
      %p1065 = pneg %p21
    $region33: #{tpu_custom_call.1} parent=1 // pred_check_branch
      %1067 = sbr.rel (%p1065) target = $region35
    $region34: #{tpu_custom_call.1} parent=1 // pred_region
      %v1068 = vpack.c.bf16 %v1039, %v1039
      %v1069 = vpack.c.bf16 %v1040, %v1040
      %v1070 = vld [vmem:[%s4] sm:$0xf]
      %v1071 = vld [vmem:[%s4 + $0x4] sm:$0xf]
      %v1072 = vld [vmem:[%s4 + $0x8] sm:$0xf]
      %v1073 = vld [vmem:[%s4 + $0xc] sm:$0xf]
      %v1074 = vld [vmem:[%s5] sm:$0x1]
      %v1076 = vlaneseq
      %v1077 = vshrl.u32 %v1076, 7
      %v1078 = vsub.s32 0, %v1077
      %v1079 = vrot.slane %v1074, %v1078
      %v1083 = vunpack.c.l.b16 %v1068
      %v1084 = vunpack.c.l.b16 %v1069
      %v1085 = vrot.slane %v1083, 7
      %v1086 = vrot.slane %v1084, 6
      %v1087 = vsel %vm238, %v1086, %v1085
      %v1088 = vpack.c.b16 %v1087, %v1087
      %1089 = vrot.lane.b32.xlu0 %v1088, 32
      %v1090 = vpop.permute.xlu0 %1089
      %v1095 = vunpack.c.l.b16 %v1070
      %v1096 = vunpack.c.l.b16 %v1071
      %v1097 = vunpack.c.l.b16 %v1072
      %v1098 = vunpack.c.l.b16 %v1073
      %v1099 = vpack.c.b16 %v1096, %v1095
      %v1100 = vpack.c.b16 %v1098, %v1097
      %v1104 = vsel %vm76, %v1090, 0
      %1106 = vmatprep.subr.bf16.mxu0 0
      %1107 = vmatpush1.bf16.msra.mxu0 %v1099
      %1108 = vmatprep.subr.bf16.mxu0 0
      %1109 = vmatpush1.bf16.msra.mxu0 %v1100
      %1110 = vmatprep.subr.bf16.mxu0 0
      %1111 = vmatpush1.bf16.msra.mxu0 0
      %1112 = vmatprep.subr.bf16.mxu0 0
      %1113 = vmatpush1.bf16.msra.mxu0 0
      %1114 = vmatprep.subr.bf16.mxu0 0
      %1115 = vmatpush1.bf16.msra.mxu0 0
      %1116 = vmatprep.subr.bf16.mxu0 0
      %1117 = vmatpush1.bf16.msra.mxu0 0
      %1118 = vmatprep.subr.bf16.mxu0 0
      %1119 = vmatpush1.bf16.msra.mxu0 0
      %1120 = vmatprep.subr.bf16.mxu0 0
      %1121 = vmatpush1.bf16.msra.mxu0 0
      %1122 = vmatprep.subr.bf16.mxu0 0
      %1123 = vmatpush1.bf16.msra.mxu0 0
      %1124 = vmatprep.subr.bf16.mxu0 0
      %1125 = vmatpush1.bf16.msra.mxu0 0
      %1126 = vmatprep.subr.bf16.mxu0 0
      %1127 = vmatpush1.bf16.msra.mxu0 0
      %1128 = vmatprep.subr.bf16.mxu0 0
      %1129 = vmatpush1.bf16.msra.mxu0 0
      %1130 = vmatprep.subr.bf16.mxu0 0
      %1131 = vmatpush1.bf16.msra.mxu0 0
      %1132 = vmatprep.subr.bf16.mxu0 0
      %1133 = vmatpush1.bf16.msra.mxu0 0
      %1134 = vmatprep.subr.bf16.mxu0 0
      %1135 = vmatpush1.bf16.msra.mxu0 0
      %1136 = vmatprep.subr.bf16.mxu0 0
      %1137 = vmatpush1.bf16.msra.mxu0 0
      %1138 = vmatprep.mubr.bf16.mxu0 0
      %1139 = vmatmul.mubr.bf16.gmra.mrb[0].mxu0 %v1104
      %v1140 = vpop.f32.mrb[0].mxu0
      %v1141 = vadd.f32 %v1079, %v1140
      %v1142 = vpop.f32.mrb[0].mxu0
      %v1143 = vpop.f32.mrb[0].mxu0
      %v1144 = vpop.f32.mrb[0].mxu0
      %1145 = vdwg.mxu0
      %vm1146 = vcmask 25600
      %1147 = vst.msk [vmem:[#allocation6] sm:$0x3] %vm1146, %v1141
    $region35: #{tpu_custom_call.1} parent=1 // pred_fallthru
      _
    // Predicated region
    $region36: #{tpu_custom_call.1} parent=1 // pred_check
      _
    $region37: #{tpu_custom_call.1} parent=1 // pred_check_branch
      %1149 = sbr.rel (0) target = $region39
    $region38: #{tpu_custom_call.1} parent=1 // pred_region
      %s1151 = ssub.s32 32, 32
      %1152 = vsyncadd [#allocation7], %s1151
      %s1154 = sshll.u32 [#allocation6], 4
      %s1155 = int_to_ptr.vmem [resolvable:$true] %s1154
      %1157 = dma.vmem_to_hbm [thread:$0]  %s1155, 32, %s6, [#allocation7]
    $region39: #{tpu_custom_call.1} parent=1 // pred_fallthru
      _
    // Predicated region
    $region40: #{tpu_custom_call.1} parent=1 // pred_check
      _
    $region41: #{tpu_custom_call.1} parent=1 // pred_check_branch
      %1159 = sbr.rel (0) target = $region43
    $region42: #{tpu_custom_call.1} parent=1 // pred_region
      %1160 = dma.done [#allocation7], 32
    $region43: #{tpu_custom_call.1} parent=1 // pred_fallthru
      _
    %1161 = vsyncpa [#allocation7], 1

</llo_original>
